<compile_context>
chip_gen: v5e
topology: v5e:2x2
jax: 0.10.0
libtpu: 0.0.40
codegen_flags: <defaults>
</compile_context>

<pallas_src>
import functools

import jax
import jax.numpy as jnp
from jax.experimental import pallas as pl
from jax.experimental.pallas import tpu as pltpu


def _fused_kernel(x_ref, mask_ref, w1_ref, b1_ref, w2_ref, b2_ref,
                  w3_ref, b3_ref, o_ref, *, H, W):
    """Fused conv3x3+LeakyReLU -> conv3x3 -> (PixelShuffle folded) conv3x3.

    Every activation is (channels, flat_padded_pixels); pixels are on the
    128-lane axis.  The flat grid is the (H+2)x(W+2) zero-padded image in
    row-major order, so a 3x3 tap (dh, dw) is a lane shift of dh*Wp + dw.
    Stages are computed over progressively shrinking extended ranges so no
    in-kernel padding/concat along the lane axis is ever needed; the 1-pixel
    zero border required by the next conv is re-imposed with a precomputed
    interior mask.
    """
    Hp, Wp = H + 2, W + 2
    L = Hp * Wp          # padded-grid size (valid range of the last stage)
    PAD = Wp + 1         # max |flat offset| of a 3x3 tap
    L2 = L + 2 * PAD     # stage-2 output range
    L1 = L + 4 * PAD     # stage-1 output range

    def conv_stage(v, w_bf16, b_f32, tap_deltas, out_len):
        # v: (Cin, out_len + 2*PAD) f32, w: (Cout, T*Cin) bf16, b: (Cout,1) f32
        # -> (Cout, out_len) f32.  Single MXU matmul with K = T*Cin.
        patches = jnp.concatenate(
            [v[:, PAD + d: PAD + d + out_len] for d in tap_deltas], axis=0)
        y = jax.lax.dot_general(
            w_bf16, patches.astype(jnp.bfloat16),
            dimension_numbers=(((1,), (0,)), ((), ())),
            preferred_element_type=jnp.float32)
        return y + b_f32

    taps9 = [(kh - 1) * Wp + (kw - 1) for kh in range(3) for kw in range(3)]

    mask1 = mask_ref[...]                        # (1, L1): 1 on interior pixels
    mask2 = mask1[:, PAD:PAD + L2]               # (1, L2)

    # conv_before_upsample: 3x3 conv + LeakyReLU(0.01)
    x = x_ref[0]                                 # (Cin_pad, L1 + 2*PAD) f32
    y1 = conv_stage(x, w1_ref[...], b1_ref[...], taps9, L1)
    y1 = jnp.where(y1 >= 0, y1, 0.01 * y1)
    y1 = y1 * mask1                              # re-impose the zero border

    # upsample conv: 3x3 conv -> 4*num_feat channels (pre-shuffle layout)
    y2 = conv_stage(y1, w2_ref[...], b2_ref[...], taps9, L2)
    y2 = y2 * mask2

    # conv_last folded through PixelShuffle(2): one 2x2-tap conv per sub-pixel
    for r in range(2):
        for s in range(2):
            rs = 2 * r + s
            taps4 = [di * Wp + dj for di in (r - 1, r) for dj in (s - 1, s)]
            o_rs = conv_stage(y2, w3_ref[rs], b3_ref[...], taps4, L)
            o_ref[0, rs, :, :] = o_rs.astype(o_ref.dtype)


def _make_w3_eff(w3_oihw):
    """Fold PixelShuffle(2) into conv_last.

    Returns (4, O, 16*F): for sub-pixel (r, s) with rs = 2r+s, the final output
    out[o, 2i+r, 2j+s] equals a 2x2-tap conv over the PRE-shuffle feature map
    (channels ordered 4c+2m+n as nn.PixelShuffle expects), with taps
    (di, dj) in (r-1, r) x (s-1, s) -- same ordering as the kernel.
    """
    O, F = w3_oihw.shape[0], w3_oihw.shape[1]

    def sel(r, d):
        # sel[m, a] == 1  iff kernel index a satisfies a == 2*d + m - r + 1
        m = jnp.arange(2)[:, None]
        a = jnp.arange(3)[None, :]
        return (a == (2 * d + m - r + 1)).astype(w3_oihw.dtype)

    per_rs = []
    for r in range(2):
        for s in range(2):
            taps = []
            for di in (r - 1, r):
                for dj in (s - 1, s):
                    eff = jnp.einsum('ocab,ma,nb->ocmn',
                                     w3_oihw, sel(r, di), sel(s, dj))
                    taps.append(eff.reshape(O, 4 * F))    # channel = 4c+2m+n
            per_rs.append(jnp.concatenate(taps, axis=1))  # (O, 16F)
    return jnp.stack(per_rs, axis=0)                       # (4, O, 16F)


def pixel_shuffle_block(x_nchw, p):
    """Forward of PixelShuffleBlcok; x is NCHW, weights are PyTorch OIHW."""
    N, Cin, H, W = x_nchw.shape
    F = p['w1'].shape[0]
    O = p['w3'].shape[0]
    Hp, Wp = H + 2, W + 2
    L = Hp * Wp
    PAD = Wp + 1
    L1 = L + 4 * PAD
    Lx = L + 6 * PAD
    Cpad = ((Cin + 7) // 8) * 8      # sublane-align the (tiny) input channels

    # Only the small Cin-channel input pays a pad/flatten pass; intermediates
    # never touch HBM.  The flat axis is extended so the kernel never pads.
    xf = jnp.pad(x_nchw, ((0, 0), (0, Cpad - Cin), (1, 1), (1, 1)))
    xf = xf.reshape(N, Cpad, L)
    xf = jnp.pad(xf, ((0, 0), (0, 0), (3 * PAD, 3 * PAD)))           # (N,Cpad,Lx)

    mask1 = jnp.pad(jnp.ones((H, W), jnp.float32), 1).reshape(1, L)
    mask1 = jnp.pad(mask1, ((0, 0), (2 * PAD, 2 * PAD)))             # (1, L1)

    # weights -> 2-D matmul form (Cout, 9*Cin), tap-major / channel-minor,
    # bf16 for the MXU; biases stay f32 as (C, 1) columns.
    w1 = jnp.pad(p['w1'].transpose(0, 2, 3, 1),                      # (F,3,3,Cin)
                 ((0, 0), (0, 0), (0, 0), (0, Cpad - Cin)))
    w1 = w1.reshape(F, 9 * Cpad).astype(jnp.bfloat16)
    w2 = p['w2'].transpose(0, 2, 3, 1).reshape(4 * F, 9 * F).astype(jnp.bfloat16)
    w3e = _make_w3_eff(p['w3']).astype(jnp.bfloat16)                 # (4,O,16F)
    b1 = p['b1'].reshape(F, 1)
    b2 = p['b2'].reshape(4 * F, 1)
    b3 = p['b3'].reshape(O, 1)

    kernel = functools.partial(_fused_kernel, H=H, W=W)

    flops = 2 * N * (L1 * F * 9 * Cpad + (L + 2 * PAD) * 4 * F * 9 * F
                     + 4 * L * O * 16 * F)
    bytes_accessed = (xf.size * 4 + mask1.size * 4 + N * 4 * O * L * 4
                      + (w1.size + w2.size + w3e.size) * 2
                      + (b1.size + b2.size + b3.size) * 4)

    out = pl.pallas_call(
        kernel,
        out_shape=jax.ShapeDtypeStruct((N, 4, O, L), jnp.float32),
        grid=(N,),
        in_specs=[
            pl.BlockSpec((1, Cpad, Lx), lambda n: (n, 0, 0)),
            pl.BlockSpec((1, L1), lambda n: (0, 0)),
            pl.BlockSpec((F, 9 * Cpad), lambda n: (0, 0)),
            pl.BlockSpec((F, 1), lambda n: (0, 0)),
            pl.BlockSpec((4 * F, 9 * F), lambda n: (0, 0)),
            pl.BlockSpec((4 * F, 1), lambda n: (0, 0)),
            pl.BlockSpec((4, O, 16 * F), lambda n: (0, 0, 0)),
            pl.BlockSpec((O, 1), lambda n: (0, 0)),
        ],
        out_specs=pl.BlockSpec((1, 4, O, L), lambda n: (n, 0, 0, 0)),
        compiler_params=pltpu.CompilerParams(
            dimension_semantics=("parallel",),
            vmem_limit_bytes=32 * 1024 * 1024),
        cost_estimate=pl.CostEstimate(
            flops=int(flops), transcendentals=0,
            bytes_accessed=int(bytes_accessed)),
    )(xf, mask1, w1, b1, w2, b2, w3e, b3)

    # TODO(synk): for real frame sizes add H-strip spatial tiling (halo = 3
    # low-res rows) instead of one full image per grid step.

    # Drop the padded-grid border and interleave the 2x2 sub-pixel outputs
    # (cheap XLA glue over the small num_out_ch-channel result only).
    out = out.reshape(N, 2, 2, O, Hp, Wp)[:, :, :, :, 1:H + 1, 1:W + 1]
    out = out.transpose(0, 3, 4, 1, 5, 2).reshape(N, O, 2 * H, 2 * W)
    return out


def init_params(key, in_feat, num_feat, num_out_ch):
    # PyTorch Conv2d default init; weights kept in PyTorch OIHW layout.
    def conv_init(k, cin, cout):
        kw_, kb_ = jax.random.split(k)
        bound = 1.0 / jnp.sqrt(cin * 9.0)
        w = jax.random.uniform(kw_, (cout, cin, 3, 3), jnp.float32, -bound, bound)
        b = jax.random.uniform(kb_, (cout,), jnp.float32, -bound, bound)
        return w, b

    k1, k2, k3 = jax.random.split(key, 3)
    w1, b1 = conv_init(k1, in_feat, num_feat)           # conv_before_upsample
    w2, b2 = conv_init(k2, num_feat, 4 * num_feat)      # upsample conv
    w3, b3 = conv_init(k3, num_feat, num_out_ch)        # conv_last
    return dict(w1=w1, b1=b1, w2=w2, b2=b2, w3=w3, b3=b3)


# ---------------- pure-JAX reference (mirrors the PyTorch module) -----------
def _ref_conv3x3(x_nchw, w_oihw, b, leaky=False):
    y = jax.lax.conv_general_dilated(
        x_nchw, w_oihw, window_strides=(1, 1), padding='SAME',
        dimension_numbers=('NCHW', 'OIHW', 'NCHW'))
    y = y + b[None, :, None, None]
    if leaky:
        y = jnp.where(y >= 0, y, 0.01 * y)
    return y


def _ref_pixel_shuffle2(x_nchw):
    N, C4, H, W = x_nchw.shape
    C = C4 // 4
    x = x_nchw.reshape(N, C, 2, 2, H, W)
    return x.transpose(0, 1, 4, 2, 5, 3).reshape(N, C, 2 * H, 2 * W)


def _ref_forward(x_nchw, p):
    y = _ref_conv3x3(x_nchw, p['w1'], p['b1'], leaky=True)
    y = _ref_conv3x3(y, p['w2'], p['b2'])
    y = _ref_pixel_shuffle2(y)
    y = _ref_conv3x3(y, p['w3'], p['b3'])
    return y


if __name__ == "__main__":
    in_feat, num_feat, num_out_ch = 4, 8, 3
    key = jax.random.PRNGKey(0)
    kx, kp = jax.random.split(key)
    x = jax.random.normal(kx, (2, in_feat, 16, 16), jnp.float32)    # NCHW
    params = init_params(kp, in_feat, num_feat, num_out_ch)

    out = jax.block_until_ready(pixel_shuffle_block(x, params))
    assert out.shape == (2, num_out_ch, 32, 32), out.shape

    ref = jax.block_until_ready(_ref_forward(x, params))
    max_err = float(jnp.max(jnp.abs(out - ref)))
    # bf16 MXU inputs with f32 accumulation -> loosened tolerance.
    assert jnp.allclose(out, ref, rtol=5e-2, atol=5e-2), max_err

    print("KERNEL_OK")
</pallas_src>

<mosaic_0001>
module attributes {stable_mosaic.version = 11 : i64} {
  func.func @_fused_kernel(%arg0: i32, %arg1: memref<1x8x438xf32, #tpu.memory_space<vmem>>, %arg2: memref<1x400xf32, #tpu.memory_space<vmem>>, %arg3: memref<8x72xbf16, #tpu.memory_space<vmem>>, %arg4: memref<8x1xf32, #tpu.memory_space<vmem>>, %arg5: memref<32x72xbf16, #tpu.memory_space<vmem>>, %arg6: memref<32x1xf32, #tpu.memory_space<vmem>>, %arg7: memref<4x3x128xbf16, #tpu.memory_space<vmem>>, %arg8: memref<3x1xf32, #tpu.memory_space<vmem>>, %arg9: memref<1x4x3x324xf32, #tpu.memory_space<vmem>>) attributes {dimension_semantics = [#tpu.dimension_semantics<parallel>], iteration_bounds = array<i64: 2>, scalar_prefetch = 0 : i64, scratch_operands = 0 : i64, tpu.core_type = #tpu.core_type<tc>, window_params = [{transform_indices = @transform_0, window_bounds = array<i64: 1, 8, 438>}, {pipeline_mode = #tpu.pipeline_mode<synchronous>, transform_indices = @transform_1, window_bounds = array<i64: 1, 400>}, {pipeline_mode = #tpu.pipeline_mode<synchronous>, transform_indices = @transform_2, window_bounds = array<i64: 8, 72>}, {pipeline_mode = #tpu.pipeline_mode<synchronous>, transform_indices = @transform_3, window_bounds = array<i64: 8, 1>}, {pipeline_mode = #tpu.pipeline_mode<synchronous>, transform_indices = @transform_4, window_bounds = array<i64: 32, 72>}, {pipeline_mode = #tpu.pipeline_mode<synchronous>, transform_indices = @transform_5, window_bounds = array<i64: 32, 1>}, {pipeline_mode = #tpu.pipeline_mode<synchronous>, transform_indices = @transform_6, window_bounds = array<i64: 4, 3, 128>}, {pipeline_mode = #tpu.pipeline_mode<synchronous>, transform_indices = @transform_7, window_bounds = array<i64: 3, 1>}, {transform_indices = @transform_8, window_bounds = array<i64: 1, 4, 3, 324>}]} {
    %c0 = arith.constant 0 : index
    %c0_0 = arith.constant 0 : index
    %0 = vector.load %arg2[%c0, %c0_0] : memref<1x400xf32, #tpu.memory_space<vmem>>, vector<1x400xf32>
    %1 = vector.extract_strided_slice %0 {offsets = [0, 19], sizes = [1, 362], strides = [1, 1]} : vector<1x400xf32> to vector<1x362xf32>
    %c0_1 = arith.constant 0 : index
    %c0_2 = arith.constant 0 : index
    %c0_3 = arith.constant 0 : index
    %2 = vector.load %arg1[%c0_1, %c0_2, %c0_3] : memref<1x8x438xf32, #tpu.memory_space<vmem>>, vector<1x8x438xf32>
    %3 = vector.shape_cast %2 : vector<1x8x438xf32> to vector<8x438xf32>
    %c0_4 = arith.constant 0 : index
    %c0_5 = arith.constant 0 : index
    %4 = vector.load %arg3[%c0_4, %c0_5] : memref<8x72xbf16, #tpu.memory_space<vmem>>, vector<8x72xbf16>
    %c0_6 = arith.constant 0 : index
    %c0_7 = arith.constant 0 : index
    %5 = vector.load %arg4[%c0_6, %c0_7] : memref<8x1xf32, #tpu.memory_space<vmem>>, vector<8x1xf32>
    %6 = vector.extract_strided_slice %3 {offsets = [0, 0], sizes = [8, 400], strides = [1, 1]} : vector<8x438xf32> to vector<8x400xf32>
    %7 = vector.extract_strided_slice %3 {offsets = [0, 1], sizes = [8, 400], strides = [1, 1]} : vector<8x438xf32> to vector<8x400xf32>
    %8 = vector.extract_strided_slice %3 {offsets = [0, 2], sizes = [8, 400], strides = [1, 1]} : vector<8x438xf32> to vector<8x400xf32>
    %9 = vector.extract_strided_slice %3 {offsets = [0, 18], sizes = [8, 400], strides = [1, 1]} : vector<8x438xf32> to vector<8x400xf32>
    %10 = vector.extract_strided_slice %3 {offsets = [0, 19], sizes = [8, 400], strides = [1, 1]} : vector<8x438xf32> to vector<8x400xf32>
    %11 = vector.extract_strided_slice %3 {offsets = [0, 20], sizes = [8, 400], strides = [1, 1]} : vector<8x438xf32> to vector<8x400xf32>
    %12 = vector.extract_strided_slice %3 {offsets = [0, 36], sizes = [8, 400], strides = [1, 1]} : vector<8x438xf32> to vector<8x400xf32>
    %13 = vector.extract_strided_slice %3 {offsets = [0, 37], sizes = [8, 400], strides = [1, 1]} : vector<8x438xf32> to vector<8x400xf32>
    %14 = vector.extract_strided_slice %3 {offsets = [0, 38], sizes = [8, 400], strides = [1, 1]} : vector<8x438xf32> to vector<8x400xf32>
    %15 = tpu.concatenate %6, %7, %8, %9, %10, %11, %12, %13, %14 in 0 : vector<8x400xf32>, vector<8x400xf32>, vector<8x400xf32>, vector<8x400xf32>, vector<8x400xf32>, vector<8x400xf32>, vector<8x400xf32>, vector<8x400xf32>, vector<8x400xf32> -> vector<72x400xf32>
    %16 = arith.truncf %15 : vector<72x400xf32> to vector<72x400xbf16>
    %cst = arith.constant dense<0.000000e+00> : vector<8x400xf32>
    %17 = tpu.matmul %4, %16, %cst {dimension_numbers = #tpu.dot_dimension_numbers<[1], [0], [0], [1], [0, 0, 1, 1], [], []>} : vector<8x72xbf16>, vector<72x400xbf16>, vector<8x400xf32> -> vector<8x400xf32>
    %18 = vector.broadcast %5 : vector<8x1xf32> to vector<8x400xf32>
    %19 = arith.addf %17, %18 : vector<8x400xf32>
    %cst_8 = arith.constant 0.000000e+00 : f32
    %20 = vector.broadcast %cst_8 : f32 to vector<8x400xf32>
    %21 = arith.cmpf oge, %19, %20 : vector<8x400xf32>
    %cst_9 = arith.constant 0.00999999977 : f32
    %22 = vector.broadcast %cst_9 : f32 to vector<8x400xf32>
    %23 = arith.mulf %22, %19 : vector<8x400xf32>
    %24 = arith.select %21, %19, %23 : vector<8x400xi1>, vector<8x400xf32>
    %25 = vector.broadcast %0 : vector<1x400xf32> to vector<8x400xf32>
    %26 = arith.mulf %24, %25 : vector<8x400xf32>
    %c0_10 = arith.constant 0 : index
    %c0_11 = arith.constant 0 : index
    %27 = vector.load %arg5[%c0_10, %c0_11] : memref<32x72xbf16, #tpu.memory_space<vmem>>, vector<32x72xbf16>
    %c0_12 = arith.constant 0 : index
    %c0_13 = arith.constant 0 : index
    %28 = vector.load %arg6[%c0_12, %c0_13] : memref<32x1xf32, #tpu.memory_space<vmem>>, vector<32x1xf32>
    %29 = vector.extract_strided_slice %26 {offsets = [0, 0], sizes = [8, 362], strides = [1, 1]} : vector<8x400xf32> to vector<8x362xf32>
    %30 = vector.extract_strided_slice %26 {offsets = [0, 1], sizes = [8, 362], strides = [1, 1]} : vector<8x400xf32> to vector<8x362xf32>
    %31 = vector.extract_strided_slice %26 {offsets = [0, 2], sizes = [8, 362], strides = [1, 1]} : vector<8x400xf32> to vector<8x362xf32>
    %32 = vector.extract_strided_slice %26 {offsets = [0, 18], sizes = [8, 362], strides = [1, 1]} : vector<8x400xf32> to vector<8x362xf32>
    %33 = vector.extract_strided_slice %26 {offsets = [0, 19], sizes = [8, 362], strides = [1, 1]} : vector<8x400xf32> to vector<8x362xf32>
    %34 = vector.extract_strided_slice %26 {offsets = [0, 20], sizes = [8, 362], strides = [1, 1]} : vector<8x400xf32> to vector<8x362xf32>
    %35 = vector.extract_strided_slice %26 {offsets = [0, 36], sizes = [8, 362], strides = [1, 1]} : vector<8x400xf32> to vector<8x362xf32>
    %36 = vector.extract_strided_slice %26 {offsets = [0, 37], sizes = [8, 362], strides = [1, 1]} : vector<8x400xf32> to vector<8x362xf32>
    %37 = vector.extract_strided_slice %26 {offsets = [0, 38], sizes = [8, 362], strides = [1, 1]} : vector<8x400xf32> to vector<8x362xf32>
    %38 = tpu.concatenate %29, %30, %31, %32, %33, %34, %35, %36, %37 in 0 : vector<8x362xf32>, vector<8x362xf32>, vector<8x362xf32>, vector<8x362xf32>, vector<8x362xf32>, vector<8x362xf32>, vector<8x362xf32>, vector<8x362xf32>, vector<8x362xf32> -> vector<72x362xf32>
    %39 = arith.truncf %38 : vector<72x362xf32> to vector<72x362xbf16>
    %cst_14 = arith.constant dense<0.000000e+00> : vector<32x362xf32>
    %40 = tpu.matmul %27, %39, %cst_14 {dimension_numbers = #tpu.dot_dimension_numbers<[1], [0], [0], [1], [0, 0, 1, 1], [], []>} : vector<32x72xbf16>, vector<72x362xbf16>, vector<32x362xf32> -> vector<32x362xf32>
    %41 = vector.broadcast %28 : vector<32x1xf32> to vector<32x362xf32>
    %42 = arith.addf %40, %41 : vector<32x362xf32>
    %43 = vector.broadcast %1 : vector<1x362xf32> to vector<32x362xf32>
    %44 = arith.mulf %42, %43 : vector<32x362xf32>
    %c0_15 = arith.constant 0 : index
    %c0_16 = arith.constant 0 : index
    %c0_17 = arith.constant 0 : index
    %45 = vector.load %arg7[%c0_15, %c0_16, %c0_17] : memref<4x3x128xbf16, #tpu.memory_space<vmem>>, vector<1x3x128xbf16>
    %46 = vector.shape_cast %45 : vector<1x3x128xbf16> to vector<3x128xbf16>
    %c0_18 = arith.constant 0 : index
    %c0_19 = arith.constant 0 : index
    %47 = vector.load %arg8[%c0_18, %c0_19] : memref<3x1xf32, #tpu.memory_space<vmem>>, vector<3x1xf32>
    %48 = vector.extract_strided_slice %44 {offsets = [0, 0], sizes = [32, 324], strides = [1, 1]} : vector<32x362xf32> to vector<32x324xf32>
    %49 = vector.extract_strided_slice %44 {offsets = [0, 1], sizes = [32, 324], strides = [1, 1]} : vector<32x362xf32> to vector<32x324xf32>
    %50 = vector.extract_strided_slice %44 {offsets = [0, 18], sizes = [32, 324], strides = [1, 1]} : vector<32x362xf32> to vector<32x324xf32>
    %51 = vector.extract_strided_slice %44 {offsets = [0, 19], sizes = [32, 324], strides = [1, 1]} : vector<32x362xf32> to vector<32x324xf32>
    %52 = tpu.concatenate %48, %49, %50, %51 in 0 : vector<32x324xf32>, vector<32x324xf32>, vector<32x324xf32>, vector<32x324xf32> -> vector<128x324xf32>
    %53 = arith.truncf %52 : vector<128x324xf32> to vector<128x324xbf16>
    %cst_20 = arith.constant dense<0.000000e+00> : vector<3x324xf32>
    %54 = tpu.matmul %46, %53, %cst_20 {dimension_numbers = #tpu.dot_dimension_numbers<[1], [0], [0], [1], [0, 0, 1, 1], [], []>} : vector<3x128xbf16>, vector<128x324xbf16>, vector<3x324xf32> -> vector<3x324xf32>
    %55 = vector.broadcast %47 : vector<3x1xf32> to vector<3x324xf32>
    %56 = arith.addf %54, %55 : vector<3x324xf32>
    %c0_21 = arith.constant 0 : index
    %c0_22 = arith.constant 0 : index
    %c0_23 = arith.constant 0 : index
    %c0_24 = arith.constant 0 : index
    %57 = vector.load %arg9[%c0_21, %c0_22, %c0_23, %c0_24] : memref<1x4x3x324xf32, #tpu.memory_space<vmem>>, vector<1x1x3x324xf32>
    %58 = vector.shape_cast %57 : vector<1x1x3x324xf32> to vector<3x324xf32>
    %59 = vector.shape_cast %56 : vector<3x324xf32> to vector<1x1x3x324xf32>
    tpu.vector_store %arg9[%c0_21, %c0_22, %c0_23, %c0_24], %59 {strides = array<i32>} : memref<1x4x3x324xf32, #tpu.memory_space<vmem>>, vector<1x1x3x324xf32>,
    %c1 = arith.constant 1 : index
    %c0_25 = arith.constant 0 : index
    %c0_26 = arith.constant 0 : index
    %60 = vector.load %arg7[%c1, %c0_25, %c0_26] : memref<4x3x128xbf16, #tpu.memory_space<vmem>>, vector<1x3x128xbf16>
    %61 = vector.shape_cast %60 : vector<1x3x128xbf16> to vector<3x128xbf16>
    %c0_27 = arith.constant 0 : index
    %c0_28 = arith.constant 0 : index
    %62 = vector.load %arg8[%c0_27, %c0_28] : memref<3x1xf32, #tpu.memory_space<vmem>>, vector<3x1xf32>
    %63 = vector.extract_strided_slice %44 {offsets = [0, 1], sizes = [32, 324], strides = [1, 1]} : vector<32x362xf32> to vector<32x324xf32>
    %64 = vector.extract_strided_slice %44 {offsets = [0, 2], sizes = [32, 324], strides = [1, 1]} : vector<32x362xf32> to vector<32x324xf32>
    %65 = vector.extract_strided_slice %44 {offsets = [0, 19], sizes = [32, 324], strides = [1, 1]} : vector<32x362xf32> to vector<32x324xf32>
    %66 = vector.extract_strided_slice %44 {offsets = [0, 20], sizes = [32, 324], strides = [1, 1]} : vector<32x362xf32> to vector<32x324xf32>
    %67 = tpu.concatenate %63, %64, %65, %66 in 0 : vector<32x324xf32>, vector<32x324xf32>, vector<32x324xf32>, vector<32x324xf32> -> vector<128x324xf32>
    %68 = arith.truncf %67 : vector<128x324xf32> to vector<128x324xbf16>
    %cst_29 = arith.constant dense<0.000000e+00> : vector<3x324xf32>
    %69 = tpu.matmul %61, %68, %cst_29 {dimension_numbers = #tpu.dot_dimension_numbers<[1], [0], [0], [1], [0, 0, 1, 1], [], []>} : vector<3x128xbf16>, vector<128x324xbf16>, vector<3x324xf32> -> vector<3x324xf32>
    %70 = vector.broadcast %62 : vector<3x1xf32> to vector<3x324xf32>
    %71 = arith.addf %69, %70 : vector<3x324xf32>
    %c0_30 = arith.constant 0 : index
    %c1_31 = arith.constant 1 : index
    %c0_32 = arith.constant 0 : index
    %c0_33 = arith.constant 0 : index
    %72 = vector.load %arg9[%c0_30, %c1_31, %c0_32, %c0_33] : memref<1x4x3x324xf32, #tpu.memory_space<vmem>>, vector<1x1x3x324xf32>
    %73 = vector.shape_cast %72 : vector<1x1x3x324xf32> to vector<3x324xf32>
    %74 = vector.shape_cast %71 : vector<3x324xf32> to vector<1x1x3x324xf32>
    tpu.vector_store %arg9[%c0_30, %c1_31, %c0_32, %c0_33], %74 {strides = array<i32>} : memref<1x4x3x324xf32, #tpu.memory_space<vmem>>, vector<1x1x3x324xf32>,
    %c2 = arith.constant 2 : index
    %c0_34 = arith.constant 0 : index
    %c0_35 = arith.constant 0 : index
    %75 = vector.load %arg7[%c2, %c0_34, %c0_35] : memref<4x3x128xbf16, #tpu.memory_space<vmem>>, vector<1x3x128xbf16>
    %76 = vector.shape_cast %75 : vector<1x3x128xbf16> to vector<3x128xbf16>
    %c0_36 = arith.constant 0 : index
    %c0_37 = arith.constant 0 : index
    %77 = vector.load %arg8[%c0_36, %c0_37] : memref<3x1xf32, #tpu.memory_space<vmem>>, vector<3x1xf32>
    %78 = vector.extract_strided_slice %44 {offsets = [0, 18], sizes = [32, 324], strides = [1, 1]} : vector<32x362xf32> to vector<32x324xf32>
    %79 = vector.extract_strided_slice %44 {offsets = [0, 19], sizes = [32, 324], strides = [1, 1]} : vector<32x362xf32> to vector<32x324xf32>
    %80 = vector.extract_strided_slice %44 {offsets = [0, 36], sizes = [32, 324], strides = [1, 1]} : vector<32x362xf32> to vector<32x324xf32>
    %81 = vector.extract_strided_slice %44 {offsets = [0, 37], sizes = [32, 324], strides = [1, 1]} : vector<32x362xf32> to vector<32x324xf32>
    %82 = tpu.concatenate %78, %79, %80, %81 in 0 : vector<32x324xf32>, vector<32x324xf32>, vector<32x324xf32>, vector<32x324xf32> -> vector<128x324xf32>
    %83 = arith.truncf %82 : vector<128x324xf32> to vector<128x324xbf16>
    %cst_38 = arith.constant dense<0.000000e+00> : vector<3x324xf32>
    %84 = tpu.matmul %76, %83, %cst_38 {dimension_numbers = #tpu.dot_dimension_numbers<[1], [0], [0], [1], [0, 0, 1, 1], [], []>} : vector<3x128xbf16>, vector<128x324xbf16>, vector<3x324xf32> -> vector<3x324xf32>
    %85 = vector.broadcast %77 : vector<3x1xf32> to vector<3x324xf32>
    %86 = arith.addf %84, %85 : vector<3x324xf32>
    %c0_39 = arith.constant 0 : index
    %c2_40 = arith.constant 2 : index
    %c0_41 = arith.constant 0 : index
    %c0_42 = arith.constant 0 : index
    %87 = vector.load %arg9[%c0_39, %c2_40, %c0_41, %c0_42] : memref<1x4x3x324xf32, #tpu.memory_space<vmem>>, vector<1x1x3x324xf32>
    %88 = vector.shape_cast %87 : vector<1x1x3x324xf32> to vector<3x324xf32>
    %89 = vector.shape_cast %86 : vector<3x324xf32> to vector<1x1x3x324xf32>
    tpu.vector_store %arg9[%c0_39, %c2_40, %c0_41, %c0_42], %89 {strides = array<i32>} : memref<1x4x3x324xf32, #tpu.memory_space<vmem>>, vector<1x1x3x324xf32>,
    %c3 = arith.constant 3 : index
    %c0_43 = arith.constant 0 : index
    %c0_44 = arith.constant 0 : index
    %90 = vector.load %arg7[%c3, %c0_43, %c0_44] : memref<4x3x128xbf16, #tpu.memory_space<vmem>>, vector<1x3x128xbf16>
    %91 = vector.shape_cast %90 : vector<1x3x128xbf16> to vector<3x128xbf16>
    %c0_45 = arith.constant 0 : index
    %c0_46 = arith.constant 0 : index
    %92 = vector.load %arg8[%c0_45, %c0_46] : memref<3x1xf32, #tpu.memory_space<vmem>>, vector<3x1xf32>
    %93 = vector.extract_strided_slice %44 {offsets = [0, 19], sizes = [32, 324], strides = [1, 1]} : vector<32x362xf32> to vector<32x324xf32>
    %94 = vector.extract_strided_slice %44 {offsets = [0, 20], sizes = [32, 324], strides = [1, 1]} : vector<32x362xf32> to vector<32x324xf32>
    %95 = vector.extract_strided_slice %44 {offsets = [0, 37], sizes = [32, 324], strides = [1, 1]} : vector<32x362xf32> to vector<32x324xf32>
    %96 = vector.extract_strided_slice %44 {offsets = [0, 38], sizes = [32, 324], strides = [1, 1]} : vector<32x362xf32> to vector<32x324xf32>
    %97 = tpu.concatenate %93, %94, %95, %96 in 0 : vector<32x324xf32>, vector<32x324xf32>, vector<32x324xf32>, vector<32x324xf32> -> vector<128x324xf32>
    %98 = arith.truncf %97 : vector<128x324xf32> to vector<128x324xbf16>
    %cst_47 = arith.constant dense<0.000000e+00> : vector<3x324xf32>
    %99 = tpu.matmul %91, %98, %cst_47 {dimension_numbers = #tpu.dot_dimension_numbers<[1], [0], [0], [1], [0, 0, 1, 1], [], []>} : vector<3x128xbf16>, vector<128x324xbf16>, vector<3x324xf32> -> vector<3x324xf32>
    %100 = vector.broadcast %92 : vector<3x1xf32> to vector<3x324xf32>
    %101 = arith.addf %99, %100 : vector<3x324xf32>
    %c0_48 = arith.constant 0 : index
    %c3_49 = arith.constant 3 : index
    %c0_50 = arith.constant 0 : index
    %c0_51 = arith.constant 0 : index
    %102 = vector.load %arg9[%c0_48, %c3_49, %c0_50, %c0_51] : memref<1x4x3x324xf32, #tpu.memory_space<vmem>>, vector<1x1x3x324xf32>
    %103 = vector.shape_cast %102 : vector<1x1x3x324xf32> to vector<3x324xf32>
    %104 = vector.shape_cast %101 : vector<3x324xf32> to vector<1x1x3x324xf32>
    tpu.vector_store %arg9[%c0_48, %c3_49, %c0_50, %c0_51], %104 {strides = array<i32>} : memref<1x4x3x324xf32, #tpu.memory_space<vmem>>, vector<1x1x3x324xf32>,
    return
  }
  func.func @transform_0(%arg0: i32) -> (i32, i32, i32) {
    %c0_i32 = arith.constant 0 : i32
    %c0_i32_0 = arith.constant 0 : i32
    %c0_i32_1 = arith.constant 0 : i32
    return %arg0, %c0_i32, %c0_i32_0 : i32, i32, i32
  }
  func.func @transform_1(%arg0: i32) -> (i32, i32) {
    %c0_i32 = arith.constant 0 : i32
    %c0_i32_0 = arith.constant 0 : i32
    %c0_i32_1 = arith.constant 0 : i32
    return %c0_i32, %c0_i32_0 : i32, i32
  }
  func.func @transform_2(%arg0: i32) -> (i32, i32) {
    %c0_i32 = arith.constant 0 : i32
    %c0_i32_0 = arith.constant 0 : i32
    %c0_i32_1 = arith.constant 0 : i32
    return %c0_i32, %c0_i32_0 : i32, i32
  }
  func.func @transform_3(%arg0: i32) -> (i32, i32) {
    %c0_i32 = arith.constant 0 : i32
    %c0_i32_0 = arith.constant 0 : i32
    %c0_i32_1 = arith.constant 0 : i32
    return %c0_i32, %c0_i32_0 : i32, i32
  }
  func.func @transform_4(%arg0: i32) -> (i32, i32) {
    %c0_i32 = arith.constant 0 : i32
    %c0_i32_0 = arith.constant 0 : i32
    %c0_i32_1 = arith.constant 0 : i32
    return %c0_i32, %c0_i32_0 : i32, i32
  }
  func.func @transform_5(%arg0: i32) -> (i32, i32) {
    %c0_i32 = arith.constant 0 : i32
    %c0_i32_0 = arith.constant 0 : i32
    %c0_i32_1 = arith.constant 0 : i32
    return %c0_i32, %c0_i32_0 : i32, i32
  }
  func.func @transform_6(%arg0: i32) -> (i32, i32, i32) {
    %c0_i32 = arith.constant 0 : i32
    %c0_i32_0 = arith.constant 0 : i32
    %c0_i32_1 = arith.constant 0 : i32
    %c0_i32_2 = arith.constant 0 : i32
    return %c0_i32, %c0_i32_0, %c0_i32_1 : i32, i32, i32
  }
  func.func @transform_7(%arg0: i32) -> (i32, i32) {
    %c0_i32 = arith.constant 0 : i32
    %c0_i32_0 = arith.constant 0 : i32
    %c0_i32_1 = arith.constant 0 : i32
    return %c0_i32, %c0_i32_0 : i32, i32
  }
  func.func @transform_8(%arg0: i32) -> (i32, i32, i32, i32) {
    %c0_i32 = arith.constant 0 : i32
    %c0_i32_0 = arith.constant 0 : i32
    %c0_i32_1 = arith.constant 0 : i32
    %c0_i32_2 = arith.constant 0 : i32
    return %arg0, %c0_i32, %c0_i32_0, %c0_i32_1 : i32, i32, i32, i32
  }
}

</mosaic_0001>

<llo_original>
// kernel: tpu_custom_call.1
$region0: #{tpu_custom_call.1}
  #allocation0 [shape = 'u32[]', space=smem, size = 0x4, offset = 0x4, fixed_abs, tag = 'smem constant byte address 0x4 - core index']
  #allocation1 [shape = 'u32[72,128]{1,0:T(1,128)}', space=vmem, size = 0x9000, scoped, tag = 'internal scratch']
  %s0 = inlined_call_operand.hbm [shape: f32[2,8,438], index: 0, kind: input, shape index: {}]
  %s1 = inlined_call_operand.vmem [shape: f32[1,400], index: 1, kind: input, shape index: {}]
  %s2 = inlined_call_operand.vmem [shape: bf16[8,72], index: 2, kind: input, shape index: {}]
  %s3 = inlined_call_operand.vmem [shape: f32[8,1], index: 3, kind: input, shape index: {}]
  %s4 = inlined_call_operand.vmem [shape: bf16[32,72], index: 4, kind: input, shape index: {}]
  %s5 = inlined_call_operand.vmem [shape: f32[32,1], index: 5, kind: input, shape index: {}]
  %s6 = inlined_call_operand.vmem [shape: bf16[4,3,128], index: 6, kind: input, shape index: {}]
  %s7 = inlined_call_operand.vmem [shape: f32[3,1], index: 7, kind: input, shape index: {}]
  %s8 = inlined_call_operand.vmem [shape: f32[2,4,3,324], index: 8, kind: output, shape index: {}]
  %s9 = sld [smem:[#allocation0]]
  $region69: #{tpu_custom_call.1} parent=0
    _
  %s11 = ssub.s32 1, %s9
  %s12 = scalar_select 0, %s11, %s9
  $region1: #{tpu_custom_call.1} parent=0
    #allocation2 [shape = 'u8[32768]{0}', space=vmem, size = 0x8000, scoped, tag = 'input window, operand 0']
    #allocation3 [shape = 's32[2]{0}', space=sflag, size = 0x8, scoped, tag = 'scoped memory for tpu_custom_call.1']
    %13 = vsyncpa [#allocation3], 0
    %s14 = scalar_lea.sflag [#allocation3], 1
    %15 = vsyncpa %s14, 0
    loop: start=0, step=1, limit=4
    $region2: #{tpu_custom_call.1} parent=1 // loop_pre_header
      _
    $region3: #{tpu_custom_call.1} parent=1 // loop_header
      %s17 = sphi 0, %s21
      %p18 = scmp.ge.s32.totalorder %s17, 4
      %s27 = sphi 0, %s29
      %s30 = sphi 0, %s27
      %s31 = sphi 0, %s30
      %s47 = sphi 0, %s31
      %s51 = sphi 0, %s51
      %s53 = sphi 0, %s51
      %s54 = sphi 0, %s53
      %s68 = sphi 0, %s54
      %s72 = sphi 0, %s72
      %s74 = sphi 0, %s72
      %s75 = sphi 0, %s74
      %s89 = sphi 0, %s75
      %s93 = sphi 0, %s93
      %s95 = sphi 0, %s93
      %s96 = sphi 0, %s95
      %s110 = sphi 0, %s96
      %s114 = sphi 0, %s114
      %s116 = sphi 0, %s114
      %s117 = sphi 0, %s116
      %s131 = sphi 0, %s117
      %s135 = sphi 0, %s135
      %s137 = sphi 0, %s135
      %s138 = sphi 0, %s137
      %s152 = sphi 0, %s138
      %s156 = sphi 0, %s156
      %s158 = sphi 0, %s156
      %s159 = sphi 0, %s158
      %s173 = sphi 0, %s159
      %s177 = sphi 0, %s177
      %s179 = sphi 0, %s177
      %s180 = sphi 0, %s179
      %s194 = sphi 0, %s180
      %s200 = sphi 0, %s202
      %s203 = sphi 0, %s200
      %s204 = sphi 0, %s203
      %s220 = sphi 0, %s204
    $region4: #{tpu_custom_call.1} parent=1 // loop_header_branch
      %20 = sbr.rel (%p18) target = $region8
    $region5: #{tpu_custom_call.1} parent=1 // loop_body
      %s22 = ssub.s32 %s17, 1
      %s23 = ssub.s32 %s17, 2
      %s24 = sadd.s32 %s17, 1
      %s25 = ssub.s32 %s17, %s24
      %p26 = scmp.eq.s32.totalorder %s25, 0
      %s28 = sadd.s32 %s27, 1
      %s29 = scalar_select %p26, %s27, %s28
      %p32 = pneg %p26
      %p33 = scmp.eq.s32.totalorder %s17, 1
      %p34 = por %p32, %p33
      %p35 = scmp.ne.s32.totalorder %s27, %s30
      %p36 = scmp.eq.s32.totalorder %s17, 0
      %p37 = por %p35, %p36
      %p38 = scmp.ne.s32.totalorder %s27, %s30
      %p39 = scmp.eq.s32.totalorder %s22, 1
      %p40 = por %p38, %p39
      %p41 = scmp.ne.s32.totalorder %s30, %s31
      %p42 = scmp.eq.s32.totalorder %s22, 0
      %p43 = por %p41, %p42
      %p44 = scmp.ne.s32.totalorder %s30, %s31
      %p45 = scmp.eq.s32.totalorder %s23, 1
      %p46 = por %p44, %p45
      %p48 = scmp.ne.s32.totalorder %s31, %s47
      %p49 = scmp.eq.s32.totalorder %s23, 0
      %p50 = por %p48, %p49
      %s52 = sadd.s32 %s51, 1
      %p55 = scmp.eq.s32.totalorder %s17, 1
      %p56 = scmp.ne.s32.totalorder %s51, %s53
      %p57 = scmp.eq.s32.totalorder %s17, 0
      %p58 = por %p56, %p57
      %p59 = scmp.ne.s32.totalorder %s51, %s53
      %p60 = scmp.eq.s32.totalorder %s22, 1
      %p61 = por %p59, %p60
      %p62 = scmp.ne.s32.totalorder %s53, %s54
      %p63 = scmp.eq.s32.totalorder %s22, 0
      %p64 = por %p62, %p63
      %p65 = scmp.ne.s32.totalorder %s53, %s54
      %p66 = scmp.eq.s32.totalorder %s23, 1
      %p67 = por %p65, %p66
      %p69 = scmp.ne.s32.totalorder %s54, %s68
      %p70 = scmp.eq.s32.totalorder %s23, 0
      %p71 = por %p69, %p70
      %s73 = sadd.s32 %s72, 1
      %p76 = scmp.eq.s32.totalorder %s17, 1
      %p77 = scmp.ne.s32.totalorder %s72, %s74
      %p78 = scmp.eq.s32.totalorder %s17, 0
      %p79 = por %p77, %p78
      %p80 = scmp.ne.s32.totalorder %s72, %s74
      %p81 = scmp.eq.s32.totalorder %s22, 1
      %p82 = por %p80, %p81
      %p83 = scmp.ne.s32.totalorder %s74, %s75
      %p84 = scmp.eq.s32.totalorder %s22, 0
      %p85 = por %p83, %p84
      %p86 = scmp.ne.s32.totalorder %s74, %s75
      %p87 = scmp.eq.s32.totalorder %s23, 1
      %p88 = por %p86, %p87
      %p90 = scmp.ne.s32.totalorder %s75, %s89
      %p91 = scmp.eq.s32.totalorder %s23, 0
      %p92 = por %p90, %p91
      %s94 = sadd.s32 %s93, 1
      %p97 = scmp.eq.s32.totalorder %s17, 1
      %p98 = scmp.ne.s32.totalorder %s93, %s95
      %p99 = scmp.eq.s32.totalorder %s17, 0
      %p100 = por %p98, %p99
      %p101 = scmp.ne.s32.totalorder %s93, %s95
      %p102 = scmp.eq.s32.totalorder %s22, 1
      %p103 = por %p101, %p102
      %p104 = scmp.ne.s32.totalorder %s95, %s96
      %p105 = scmp.eq.s32.totalorder %s22, 0
      %p106 = por %p104, %p105
      %p107 = scmp.ne.s32.totalorder %s95, %s96
      %p108 = scmp.eq.s32.totalorder %s23, 1
      %p109 = por %p107, %p108
      %p111 = scmp.ne.s32.totalorder %s96, %s110
      %p112 = scmp.eq.s32.totalorder %s23, 0
      %p113 = por %p111, %p112
      %s115 = sadd.s32 %s114, 1
      %p118 = scmp.eq.s32.totalorder %s17, 1
      %p119 = scmp.ne.s32.totalorder %s114, %s116
      %p120 = scmp.eq.s32.totalorder %s17, 0
      %p121 = por %p119, %p120
      %p122 = scmp.ne.s32.totalorder %s114, %s116
      %p123 = scmp.eq.s32.totalorder %s22, 1
      %p124 = por %p122, %p123
      %p125 = scmp.ne.s32.totalorder %s116, %s117
      %p126 = scmp.eq.s32.totalorder %s22, 0
      %p127 = por %p125, %p126
      %p128 = scmp.ne.s32.totalorder %s116, %s117
      %p129 = scmp.eq.s32.totalorder %s23, 1
      %p130 = por %p128, %p129
      %p132 = scmp.ne.s32.totalorder %s117, %s131
      %p133 = scmp.eq.s32.totalorder %s23, 0
      %p134 = por %p132, %p133
      %s136 = sadd.s32 %s135, 1
      %p139 = scmp.eq.s32.totalorder %s17, 1
      %p140 = scmp.ne.s32.totalorder %s135, %s137
      %p141 = scmp.eq.s32.totalorder %s17, 0
      %p142 = por %p140, %p141
      %p143 = scmp.ne.s32.totalorder %s135, %s137
      %p144 = scmp.eq.s32.totalorder %s22, 1
      %p145 = por %p143, %p144
      %p146 = scmp.ne.s32.totalorder %s137, %s138
      %p147 = scmp.eq.s32.totalorder %s22, 0
      %p148 = por %p146, %p147
      %p149 = scmp.ne.s32.totalorder %s137, %s138
      %p150 = scmp.eq.s32.totalorder %s23, 1
      %p151 = por %p149, %p150
      %p153 = scmp.ne.s32.totalorder %s138, %s152
      %p154 = scmp.eq.s32.totalorder %s23, 0
      %p155 = por %p153, %p154
      %s157 = sadd.s32 %s156, 1
      %p160 = scmp.eq.s32.totalorder %s17, 1
      %p161 = scmp.ne.s32.totalorder %s156, %s158
      %p162 = scmp.eq.s32.totalorder %s17, 0
      %p163 = por %p161, %p162
      %p164 = scmp.ne.s32.totalorder %s156, %s158
      %p165 = scmp.eq.s32.totalorder %s22, 1
      %p166 = por %p164, %p165
      %p167 = scmp.ne.s32.totalorder %s158, %s159
      %p168 = scmp.eq.s32.totalorder %s22, 0
      %p169 = por %p167, %p168
      %p170 = scmp.ne.s32.totalorder %s158, %s159
      %p171 = scmp.eq.s32.totalorder %s23, 1
      %p172 = por %p170, %p171
      %p174 = scmp.ne.s32.totalorder %s159, %s173
      %p175 = scmp.eq.s32.totalorder %s23, 0
      %p176 = por %p174, %p175
      %s178 = sadd.s32 %s177, 1
      %p181 = scmp.eq.s32.totalorder %s17, 1
      %p182 = scmp.ne.s32.totalorder %s177, %s179
      %p183 = scmp.eq.s32.totalorder %s17, 0
      %p184 = por %p182, %p183
      %p185 = scmp.ne.s32.totalorder %s177, %s179
      %p186 = scmp.eq.s32.totalorder %s22, 1
      %p187 = por %p185, %p186
      %p188 = scmp.ne.s32.totalorder %s179, %s180
      %p189 = scmp.eq.s32.totalorder %s22, 0
      %p190 = por %p188, %p189
      %p191 = scmp.ne.s32.totalorder %s179, %s180
      %p192 = scmp.eq.s32.totalorder %s23, 1
      %p193 = por %p191, %p192
      %p195 = scmp.ne.s32.totalorder %s180, %s194
      %p196 = scmp.eq.s32.totalorder %s23, 0
      %p197 = por %p195, %p196
      %s198 = ssub.s32 %s17, %s24
      %p199 = scmp.eq.s32.totalorder %s198, 0
      %s201 = sadd.s32 %s200, 1
      %s202 = scalar_select %p199, %s200, %s201
      %p205 = pneg %p199
      %p206 = scmp.eq.s32.totalorder %s17, 1
      %p207 = por %p205, %p206
      %p208 = scmp.ne.s32.totalorder %s200, %s203
      %p209 = scmp.eq.s32.totalorder %s17, 0
      %p210 = por %p208, %p209
      %p211 = scmp.ne.s32.totalorder %s200, %s203
      %p212 = scmp.eq.s32.totalorder %s22, 1
      %p213 = por %p211, %p212
      %p214 = scmp.ne.s32.totalorder %s203, %s204
      %p215 = scmp.eq.s32.totalorder %s22, 0
      %p216 = por %p214, %p215
      %p217 = scmp.ne.s32.totalorder %s203, %s204
      %p218 = scmp.eq.s32.totalorder %s23, 1
      %p219 = por %p217, %p218
      %p221 = scmp.ne.s32.totalorder %s204, %s220
      %p222 = scmp.eq.s32.totalorder %s23, 0
      %p223 = por %p221, %p222
      %p224 = scmp.le.s32.totalorder 1, %s17
      %p225 = scmp.lt.s32.totalorder %s17, 3
      %p226 = pnand %p224, %p225
      %p227 = pneg %p226
      // Predicated region
      $region9: #{tpu_custom_call.1} parent=5 // pred_check
        _
      $region10: #{tpu_custom_call.1} parent=5 // pred_check_branch
        %229 = sbr.rel (%p226) target = $region12
      $region11: #{tpu_custom_call.1} parent=5 // pred_region
        %s230 = ssub.s32 %s17, 1
        // Predicated region
        $region13: #{tpu_custom_call.1} parent=11 // pred_check
          %p231 = pneg %p64
        $region14: #{tpu_custom_call.1} parent=11 // pred_check_branch
          %233 = sbr.rel (%p231) target = $region16
        $region15: #{tpu_custom_call.1} parent=11 // pred_region
          _
        $region16: #{tpu_custom_call.1} parent=11 // pred_fallthru
          _
        // Predicated region
        $region17: #{tpu_custom_call.1} parent=11 // pred_check
          %p234 = pneg %p85
        $region18: #{tpu_custom_call.1} parent=11 // pred_check_branch
          %236 = sbr.rel (%p234) target = $region20
        $region19: #{tpu_custom_call.1} parent=11 // pred_region
          _
        $region20: #{tpu_custom_call.1} parent=11 // pred_fallthru
          _
        // Predicated region
        $region21: #{tpu_custom_call.1} parent=11 // pred_check
          %p237 = pneg %p106
        $region22: #{tpu_custom_call.1} parent=11 // pred_check_branch
          %239 = sbr.rel (%p237) target = $region24
        $region23: #{tpu_custom_call.1} parent=11 // pred_region
          _
        $region24: #{tpu_custom_call.1} parent=11 // pred_fallthru
          _
        // Predicated region
        $region25: #{tpu_custom_call.1} parent=11 // pred_check
          %p240 = pneg %p127
        $region26: #{tpu_custom_call.1} parent=11 // pred_check_branch
          %242 = sbr.rel (%p240) target = $region28
        $region27: #{tpu_custom_call.1} parent=11 // pred_region
          _
        $region28: #{tpu_custom_call.1} parent=11 // pred_fallthru
          _
        // Predicated region
        $region29: #{tpu_custom_call.1} parent=11 // pred_check
          %p243 = pneg %p148
        $region30: #{tpu_custom_call.1} parent=11 // pred_check_branch
          %245 = sbr.rel (%p243) target = $region32
        $region31: #{tpu_custom_call.1} parent=11 // pred_region
          _
        $region32: #{tpu_custom_call.1} parent=11 // pred_fallthru
          _
        // Predicated region
        $region33: #{tpu_custom_call.1} parent=11 // pred_check
          %p246 = pneg %p169
        $region34: #{tpu_custom_call.1} parent=11 // pred_check_branch
          %248 = sbr.rel (%p246) target = $region36
        $region35: #{tpu_custom_call.1} parent=11 // pred_region
          _
        $region36: #{tpu_custom_call.1} parent=11 // pred_fallthru
          _
        // Predicated region
        $region37: #{tpu_custom_call.1} parent=11 // pred_check
          %p249 = pneg %p190
        $region38: #{tpu_custom_call.1} parent=11 // pred_check_branch
          %251 = sbr.rel (%p249) target = $region40
        $region39: #{tpu_custom_call.1} parent=11 // pred_region
          _
        $region40: #{tpu_custom_call.1} parent=11 // pred_fallthru
          _
      $region12: #{tpu_custom_call.1} parent=5 // pred_fallthru
        _
      %p252 = scmp.lt.s32.totalorder %s17, 2
      // Predicated region
      $region41: #{tpu_custom_call.1} parent=5 // pred_check
        %p253 = pneg %p252
      $region42: #{tpu_custom_call.1} parent=5 // pred_check_branch
        %255 = sbr.rel (%p253) target = $region44
      $region43: #{tpu_custom_call.1} parent=5 // pred_region
        // Predicated region
        $region45: #{tpu_custom_call.1} parent=43 // pred_check
          %p256 = pneg %p37
        $region46: #{tpu_custom_call.1} parent=43 // pred_check_branch
          %258 = sbr.rel (%p256) target = $region48
        $region47: #{tpu_custom_call.1} parent=43 // pred_region
          %s259 = sand.u32 %s27, 1
          %s260 = scalar_lea.sflag [#allocation3], %s259
          %s261 = sand.u32 %s27, 1
          %s262 = smul.addr %s261, 32
          %s263 = scalar_lea.vmem [#allocation2], %s262
          %265 = vsyncadd %s260, 0
          %s266 = smul.addr %s17, 4
          %s267 = smul.addr %s266, 8
          %s268 = scalar_lea.hbm %s0, %s267
          %s270 = sshll.u32 %s268, 4
          %s271 = int_to_ptr.hbm [resolvable:$true] %s270
          %s272 = sshll.u32 %s263, 4
          %s273 = int_to_ptr.vmem [resolvable:$true] %s272
          %275 = dma.hbm_to_vmem [thread:$0]  %s271, 512, %s273, %s260
        $region48: #{tpu_custom_call.1} parent=43 // pred_fallthru
          _
      $region44: #{tpu_custom_call.1} parent=5 // pred_fallthru
        _
      %p276 = scmp.le.s32.totalorder 1, %s17
      %p277 = scmp.lt.s32.totalorder %s17, 3
      %p278 = pnand %p276, %p277
      %p279 = pneg %p278
      // Predicated region
      $region49: #{tpu_custom_call.1} parent=5 // pred_check
        _
      $region50: #{tpu_custom_call.1} parent=5 // pred_check_branch
        %281 = sbr.rel (%p278) target = $region52
      $region51: #{tpu_custom_call.1} parent=5 // pred_region
        %s282 = ssub.s32 %s17, 1
        %s283 = sand.u32 %s30, 1
        %s284 = scalar_lea.sflag [#allocation3], %s283
        %s285 = sand.u32 %s30, 1
        %s286 = smul.addr %s285, 32
        %s287 = scalar_lea.vmem [#allocation2], %s286
        // Predicated region
        $region53: #{tpu_custom_call.1} parent=51 // pred_check
          %p288 = pneg %p43
        $region54: #{tpu_custom_call.1} parent=51 // pred_check_branch
          %290 = sbr.rel (%p288) target = $region56
        $region55: #{tpu_custom_call.1} parent=51 // pred_region
          %292 = dma.done %s284, 512
        $region56: #{tpu_custom_call.1} parent=51 // pred_fallthru
          _
        %s293 = sand.u32 %s30, 1
        %s294 = scalar_lea.sflag [#allocation3], %s293
        %s295 = sand.u32 %s30, 1
        %s296 = smul.addr %s295, 32
        %s297 = scalar_lea.vmem [#allocation2], %s296
        %p298 = pneg %p43
        %p299 = pneg %p40
        %p300 = pneg %p64
        %p301 = pneg %p61
        %p302 = pneg %p85
        %p303 = pneg %p82
        %p304 = pneg %p106
        %p305 = pneg %p103
        %p306 = pneg %p127
        %p307 = pneg %p124
        %p308 = pneg %p148
        %p309 = pneg %p145
        %p310 = pneg %p169
        %p311 = pneg %p166
        %p312 = pneg %p190
        %p313 = pneg %p187
        %p314 = pneg %p216
        %p315 = pneg %p213
        %p316 = scmp.lt.s32.totalorder %s22, 1
        %s317 = scalar_select %p316, %s22, 1
        %s318 = smul.addr %s317, 12
        %s319 = smul.addr %s318, 4
        %s320 = scalar_lea.vmem %s8, %s319
        %p321 = scmp.lt.s32.totalorder %s22, 1
        %s322 = scalar_select %p321, %s22, 1
        %s323 = smul.addr %s322, 12
        %s324 = smul.addr %s323, 4
        %s325 = scalar_lea.vmem %s8, %s324
        %v327 = vld [vmem:[%s1] sm:$0xf]
        %v328 = vld [vmem:[%s287] sm:$0xff]
        %v329 = vld [vmem:[%s287 + $0x8] sm:$0xff]
        %v330 = vld [vmem:[%s287 + $0x10] sm:$0xff]
        %v331 = vld [vmem:[%s287 + $0x18] sm:$0xff]
        %v332 = vld [vmem:[%s2] sm:$0xf]
        %v333 = vld [vmem:[%s3] sm:$0xff]
        %338 = vrot.lane.b32.xlu0 %v328, 127
        %v339 = vpop.permute.xlu0 %338
        %340 = vrot.lane.b32.xlu0 %v329, 127
        %v341 = vpop.permute.xlu0 %340
        %342 = vrot.lane.b32.xlu0 %v330, 127
        %v343 = vpop.permute.xlu0 %342
        %344 = vrot.lane.b32.xlu0 %v331, 127
        %v345 = vpop.permute.xlu0 %344
        %vm346 = vcmask 1039360
        %v347 = vsel %vm346, %v339, %v341
        %v348 = vsel %vm346, %v341, %v343
        %v349 = vsel %vm346, %v343, %v345
        %354 = vrot.lane.b32.xlu0 %v328, 126
        %v355 = vpop.permute.xlu0 %354
        %356 = vrot.lane.b32.xlu0 %v329, 126
        %v357 = vpop.permute.xlu0 %356
        %358 = vrot.lane.b32.xlu0 %v330, 126
        %v359 = vpop.permute.xlu0 %358
        %360 = vrot.lane.b32.xlu0 %v331, 126
        %v361 = vpop.permute.xlu0 %360
        %vm362 = vcmask 1031168
        %v363 = vsel %vm362, %v355, %v357
        %v364 = vsel %vm362, %v357, %v359
        %v365 = vsel %vm362, %v359, %v361
        %370 = vrot.lane.b32.xlu0 %v328, 110
        %v371 = vpop.permute.xlu0 %370
        %372 = vrot.lane.b32.xlu0 %v329, 110
        %v373 = vpop.permute.xlu0 %372
        %374 = vrot.lane.b32.xlu0 %v330, 110
        %v375 = vpop.permute.xlu0 %374
        %376 = vrot.lane.b32.xlu0 %v331, 110
        %v377 = vpop.permute.xlu0 %376
        %vm378 = vcmask 900096
        %v379 = vsel %vm378, %v371, %v373
        %v380 = vsel %vm378, %v373, %v375
        %v381 = vsel %vm378, %v375, %v377
        %386 = vrot.lane.b32.xlu0 %v328, 109
        %v387 = vpop.permute.xlu0 %386
        %388 = vrot.lane.b32.xlu0 %v329, 109
        %v389 = vpop.permute.xlu0 %388
        %390 = vrot.lane.b32.xlu0 %v330, 109
        %v391 = vpop.permute.xlu0 %390
        %392 = vrot.lane.b32.xlu0 %v331, 109
        %v393 = vpop.permute.xlu0 %392
        %vm394 = vcmask 891904
        %v395 = vsel %vm394, %v387, %v389
        %v396 = vsel %vm394, %v389, %v391
        %v397 = vsel %vm394, %v391, %v393
        %402 = vrot.lane.b32.xlu0 %v328, 108
        %v403 = vpop.permute.xlu0 %402
        %404 = vrot.lane.b32.xlu0 %v329, 108
        %v405 = vpop.permute.xlu0 %404
        %406 = vrot.lane.b32.xlu0 %v330, 108
        %v407 = vpop.permute.xlu0 %406
        %408 = vrot.lane.b32.xlu0 %v331, 108
        %v409 = vpop.permute.xlu0 %408
        %vm410 = vcmask 883712
        %v411 = vsel %vm410, %v403, %v405
        %v412 = vsel %vm410, %v405, %v407
        %v413 = vsel %vm410, %v407, %v409
        %418 = vrot.lane.b32.xlu0 %v328, 92
        %v419 = vpop.permute.xlu0 %418
        %420 = vrot.lane.b32.xlu0 %v329, 92
        %v421 = vpop.permute.xlu0 %420
        %422 = vrot.lane.b32.xlu0 %v330, 92
        %v423 = vpop.permute.xlu0 %422
        %424 = vrot.lane.b32.xlu0 %v331, 92
        %v425 = vpop.permute.xlu0 %424
        %vm426 = vcmask 752640
        %v427 = vsel %vm426, %v419, %v421
        %v428 = vsel %vm426, %v421, %v423
        %v429 = vsel %vm426, %v423, %v425
        %434 = vrot.lane.b32.xlu0 %v328, 91
        %v435 = vpop.permute.xlu0 %434
        %436 = vrot.lane.b32.xlu0 %v329, 91
        %v437 = vpop.permute.xlu0 %436
        %438 = vrot.lane.b32.xlu0 %v330, 91
        %v439 = vpop.permute.xlu0 %438
        %440 = vrot.lane.b32.xlu0 %v331, 91
        %v441 = vpop.permute.xlu0 %440
        %vm442 = vcmask 744448
        %v443 = vsel %vm442, %v435, %v437
        %v444 = vsel %vm442, %v437, %v439
        %v445 = vsel %vm442, %v439, %v441
        %450 = vrot.lane.b32.xlu0 %v328, 90
        %v451 = vpop.permute.xlu0 %450
        %452 = vrot.lane.b32.xlu0 %v329, 90
        %v453 = vpop.permute.xlu0 %452
        %454 = vrot.lane.b32.xlu0 %v330, 90
        %v455 = vpop.permute.xlu0 %454
        %456 = vrot.lane.b32.xlu0 %v331, 90
        %v457 = vpop.permute.xlu0 %456
        %vm458 = vcmask 736256
        %v459 = vsel %vm458, %v451, %v453
        %v460 = vsel %vm458, %v453, %v455
        %v461 = vsel %vm458, %v455, %v457
        %v466 = vpack.c.bf16 %v347, %v328
        %v467 = vpack.c.bf16 %v348, %v329
        %v468 = vpack.c.bf16 %v349, %v330
        %v469 = vpack.c.bf16 %v345, %v331
        %v470 = vpack.c.bf16 %v379, %v363
        %v471 = vpack.c.bf16 %v380, %v364
        %v472 = vpack.c.bf16 %v381, %v365
        %v473 = vpack.c.bf16 %v377, %v361
        %v474 = vpack.c.bf16 %v411, %v395
        %v475 = vpack.c.bf16 %v412, %v396
        %v476 = vpack.c.bf16 %v413, %v397
        %v477 = vpack.c.bf16 %v409, %v393
        %v478 = vpack.c.bf16 %v443, %v427
        %v479 = vpack.c.bf16 %v444, %v428
        %v480 = vpack.c.bf16 %v445, %v429
        %v481 = vpack.c.bf16 %v441, %v425
        %v482 = vpack.c.bf16 %v459, %v459
        %v483 = vpack.c.bf16 %v460, %v460
        %v484 = vpack.c.bf16 %v461, %v461
        %v485 = vpack.c.bf16 %v457, %v457
        %487 = vset.pattern.permute.xlu0 0
        %488 = vperm.xlu0 %487, %v333
        %v489 = vpop.permute.xlu0 %488
        %vm491 = vcmask 588800
        %v493 = vsel %vm491, %v332, 0
        %vm495 = vcmask 1043456
        %v497 = vsel %vm495, %v482, 0
        %v500 = vsel %vm495, %v483, 0
        %v503 = vsel %vm495, %v484, 0
        %v506 = vsel %vm495, %v485, 0
        %508 = vmatpush.bf16.msra.mxu0 0
        %509 = vmatpush.bf16.msra.mxu0 0
        %510 = vmatpush.bf16.msra.mxu0 0
        %511 = vmatpush.bf16.msra.mxu0 %v497
        %512 = vmatpush.bf16.msra.mxu0 %v478
        %513 = vmatpush.bf16.msra.mxu0 %v474
        %514 = vmatpush.bf16.msra.mxu0 %v470
        %515 = vmatpush.bf16.msra.mxu0 %v466
        %516 = vmatmul.bf16.gmra.mxu0 %v493
        %v517 = vpop.f32.mrf.mxu0
        %v518 = vadd.f32 %v489, %v517
        %v519 = vpop.f32.mrf.mxu0
        %520 = vdwg.mxu0
        %521 = vmatpush.bf16.msra.mxu0 0
        %522 = vmatpush.bf16.msra.mxu0 0
        %523 = vmatpush.bf16.msra.mxu0 0
        %524 = vmatpush.bf16.msra.mxu0 %v500
        %525 = vmatpush.bf16.msra.mxu0 %v479
        %526 = vmatpush.bf16.msra.mxu0 %v475
        %527 = vmatpush.bf16.msra.mxu0 %v471
        %528 = vmatpush.bf16.msra.mxu0 %v467
        %529 = vmatmul.bf16.gmra.mxu0 %v493
        %v530 = vpop.f32.mrf.mxu0
        %v531 = vadd.f32 %v489, %v530
        %v532 = vpop.f32.mrf.mxu0
        %533 = vdwg.mxu0
        %534 = vmatpush.bf16.msra.mxu0 0
        %535 = vmatpush.bf16.msra.mxu0 0
        %536 = vmatpush.bf16.msra.mxu0 0
        %537 = vmatpush.bf16.msra.mxu0 %v503
        %538 = vmatpush.bf16.msra.mxu0 %v480
        %539 = vmatpush.bf16.msra.mxu0 %v476
        %540 = vmatpush.bf16.msra.mxu0 %v472
        %541 = vmatpush.bf16.msra.mxu0 %v468
        %542 = vmatmul.bf16.gmra.mxu0 %v493
        %v543 = vpop.f32.mrf.mxu0
        %v544 = vadd.f32 %v489, %v543
        %v545 = vpop.f32.mrf.mxu0
        %546 = vdwg.mxu0
        %547 = vmatpush.bf16.msra.mxu0 0
        %548 = vmatpush.bf16.msra.mxu0 0
        %549 = vmatpush.bf16.msra.mxu0 0
        %550 = vmatpush.bf16.msra.mxu0 %v506
        %551 = vmatpush.bf16.msra.mxu0 %v481
        %552 = vmatpush.bf16.msra.mxu0 %v477
        %553 = vmatpush.bf16.msra.mxu0 %v473
        %554 = vmatpush.bf16.msra.mxu0 %v469
        %555 = vmatmul.bf16.gmra.mxu0 %v493
        %v556 = vpop.f32.mrf.mxu0
        %v557 = vadd.f32 %v489, %v556
        %v558 = vpop.f32.mrf.mxu0
        %559 = vdwg.mxu0
        %vm560 = vcmp.ge.f32.partialorder %v518, 0.0
        %vm561 = vcmp.ge.f32.partialorder %v531, 0.0
        %vm562 = vcmp.ge.f32.partialorder %v544, 0.0
        %vm563 = vcmp.ge.f32.partialorder %v557, 0.0
        %v564 = vmul.f32 %v518, 0.01
        %v565 = vmul.f32 %v531, 0.01
        %v566 = vmul.f32 %v544, 0.01
        %v567 = vmul.f32 %v557, 0.01
        %v568 = vsel %vm560, %v518, %v564
        %v569 = vsel %vm561, %v531, %v565
        %v570 = vsel %vm562, %v544, %v566
        %v571 = vsel %vm563, %v557, %v567
        %v573 = vperm.slane %v327, 0
        %v574 = vperm.slane %v327, 1
        %v575 = vperm.slane %v327, 2
        %v576 = vperm.slane %v327, 3
        %v581 = vmul.f32 %v568, %v573
        %v582 = vmul.f32 %v569, %v574
        %v583 = vmul.f32 %v570, %v575
        %v584 = vmul.f32 %v571, %v576
        %v585 = vld [vmem:[%s4] sm:$0xf]
        %v586 = vld [vmem:[%s4 + $0x4] sm:$0xf]
        %v587 = vld [vmem:[%s4 + $0x8] sm:$0xf]
        %v588 = vld [vmem:[%s4 + $0xc] sm:$0xf]
        %v589 = vld [vmem:[%s5] sm:$0xff]
        %v590 = vld [vmem:[%s5 + $0x8] sm:$0xff]
        %v591 = vld [vmem:[%s5 + $0x10] sm:$0xff]
        %v592 = vld [vmem:[%s5 + $0x18] sm:$0xff]
        %596 = vrot.lane.b32.xlu0 %v581, 127
        %v597 = vpop.permute.xlu0 %596
        %598 = vrot.lane.b32.xlu0 %v582, 127
        %v599 = vpop.permute.xlu0 %598
        %600 = vrot.lane.b32.xlu0 %v583, 127
        %v601 = vpop.permute.xlu0 %600
        %v602 = vsel %vm346, %v597, %v599
        %v603 = vsel %vm346, %v599, %v601
        %607 = vrot.lane.b32.xlu0 %v581, 126
        %v608 = vpop.permute.xlu0 %607
        %609 = vrot.lane.b32.xlu0 %v582, 126
        %v610 = vpop.permute.xlu0 %609
        %611 = vrot.lane.b32.xlu0 %v583, 126
        %v612 = vpop.permute.xlu0 %611
        %v613 = vsel %vm362, %v608, %v610
        %v614 = vsel %vm362, %v610, %v612
        %618 = vrot.lane.b32.xlu0 %v581, 110
        %v619 = vpop.permute.xlu0 %618
        %620 = vrot.lane.b32.xlu0 %v582, 110
        %v621 = vpop.permute.xlu0 %620
        %622 = vrot.lane.b32.xlu0 %v583, 110
        %v623 = vpop.permute.xlu0 %622
        %v624 = vsel %vm378, %v619, %v621
        %v625 = vsel %vm378, %v621, %v623
        %629 = vrot.lane.b32.xlu0 %v581, 109
        %v630 = vpop.permute.xlu0 %629
        %631 = vrot.lane.b32.xlu0 %v582, 109
        %v632 = vpop.permute.xlu0 %631
        %633 = vrot.lane.b32.xlu0 %v583, 109
        %v634 = vpop.permute.xlu0 %633
        %v635 = vsel %vm394, %v630, %v632
        %v636 = vsel %vm394, %v632, %v634
        %640 = vrot.lane.b32.xlu0 %v581, 108
        %v641 = vpop.permute.xlu0 %640
        %642 = vrot.lane.b32.xlu0 %v582, 108
        %v643 = vpop.permute.xlu0 %642
        %644 = vrot.lane.b32.xlu0 %v583, 108
        %v645 = vpop.permute.xlu0 %644
        %v646 = vsel %vm410, %v641, %v643
        %v647 = vsel %vm410, %v643, %v645
        %652 = vrot.lane.b32.xlu0 %v581, 92
        %v653 = vpop.permute.xlu0 %652
        %654 = vrot.lane.b32.xlu0 %v582, 92
        %v655 = vpop.permute.xlu0 %654
        %656 = vrot.lane.b32.xlu0 %v583, 92
        %v657 = vpop.permute.xlu0 %656
        %658 = vrot.lane.b32.xlu0 %v584, 92
        %v659 = vpop.permute.xlu0 %658
        %v660 = vsel %vm426, %v653, %v655
        %v661 = vsel %vm426, %v655, %v657
        %v662 = vsel %vm426, %v657, %v659
        %666 = vrot.lane.b32.xlu0 %v581, 91
        %v667 = vpop.permute.xlu0 %666
        %668 = vrot.lane.b32.xlu0 %v582, 91
        %v669 = vpop.permute.xlu0 %668
        %670 = vrot.lane.b32.xlu0 %v583, 91
        %v671 = vpop.permute.xlu0 %670
        %672 = vrot.lane.b32.xlu0 %v584, 91
        %v673 = vpop.permute.xlu0 %672
        %v674 = vsel %vm442, %v667, %v669
        %v675 = vsel %vm442, %v669, %v671
        %v676 = vsel %vm442, %v671, %v673
        %680 = vrot.lane.b32.xlu0 %v581, 90
        %v681 = vpop.permute.xlu0 %680
        %682 = vrot.lane.b32.xlu0 %v582, 90
        %v683 = vpop.permute.xlu0 %682
        %684 = vrot.lane.b32.xlu0 %v583, 90
        %v685 = vpop.permute.xlu0 %684
        %686 = vrot.lane.b32.xlu0 %v584, 90
        %v687 = vpop.permute.xlu0 %686
        %v688 = vsel %vm458, %v681, %v683
        %v689 = vsel %vm458, %v683, %v685
        %v690 = vsel %vm458, %v685, %v687
        %v694 = vpack.c.bf16 %v602, %v581
        %v695 = vpack.c.bf16 %v603, %v582
        %v696 = vpack.c.bf16 %v601, %v583
        %v697 = vpack.c.bf16 %v624, %v613
        %v698 = vpack.c.bf16 %v625, %v614
        %v699 = vpack.c.bf16 %v623, %v612
        %v700 = vpack.c.bf16 %v646, %v635
        %v701 = vpack.c.bf16 %v647, %v636
        %v702 = vpack.c.bf16 %v645, %v634
        %v703 = vpack.c.bf16 %v674, %v660
        %v704 = vpack.c.bf16 %v675, %v661
        %v705 = vpack.c.bf16 %v676, %v662
        %v706 = vpack.c.bf16 %v688, %v688
        %v707 = vpack.c.bf16 %v689, %v689
        %v708 = vpack.c.bf16 %v690, %v690
        %710 = vset.pattern.permute.xlu0 0
        %711 = vperm.xlu0 %710, %v589
        %v712 = vpop.permute.xlu0 %711
        %715 = vset.pattern.permute.xlu0 0
        %716 = vperm.xlu0 %715, %v590
        %v717 = vpop.permute.xlu0 %716
        %720 = vset.pattern.permute.xlu0 0
        %721 = vperm.xlu0 %720, %v591
        %v722 = vpop.permute.xlu0 %721
        %725 = vset.pattern.permute.xlu0 0
        %726 = vperm.xlu0 %725, %v592
        %v727 = vpop.permute.xlu0 %726
        %v733 = vunpack.c.l.b16 %v585
        %v734 = vunpack.c.l.b16 %v586
        %v735 = vunpack.c.l.b16 %v587
        %v736 = vunpack.c.l.b16 %v588
        %v737 = vpack.c.b16 %v734, %v733
        %v738 = vpack.c.b16 %v736, %v735
        %v740 = vsel %vm491, %v737, 0
        %v743 = vsel %vm491, %v738, 0
        %v746 = vsel %vm495, %v706, 0
        %v749 = vsel %vm495, %v707, 0
        %v752 = vsel %vm495, %v708, 0
        %754 = vmatpush.bf16.msra.mxu0 0
        %755 = vmatpush.bf16.msra.mxu0 0
        %756 = vmatpush.bf16.msra.mxu0 0
        %757 = vmatpush.bf16.msra.mxu0 %v746
        %758 = vmatpush.bf16.msra.mxu0 %v703
        %759 = vmatpush.bf16.msra.mxu0 %v700
        %760 = vmatpush.bf16.msra.mxu0 %v697
        %761 = vmatpush.bf16.msra.mxu0 %v694
        %762 = vmatmul.bf16.gmra.mxu0 %v740
        %v763 = vpop.f32.mrf.mxu0
        %v764 = vadd.f32 %v712, %v763
        %v765 = vpop.f32.mrf.mxu0
        %v766 = vadd.f32 %v717, %v765
        %767 = vmatmul.bf16.gmra.mxu0 %v743
        %v768 = vpop.f32.mrf.mxu0
        %v769 = vadd.f32 %v722, %v768
        %v770 = vpop.f32.mrf.mxu0
        %v771 = vadd.f32 %v727, %v770
        %772 = vdwg.mxu0
        %773 = vmatpush.bf16.msra.mxu0 0
        %774 = vmatpush.bf16.msra.mxu0 0
        %775 = vmatpush.bf16.msra.mxu0 0
        %776 = vmatpush.bf16.msra.mxu0 %v749
        %777 = vmatpush.bf16.msra.mxu0 %v704
        %778 = vmatpush.bf16.msra.mxu0 %v701
        %779 = vmatpush.bf16.msra.mxu0 %v698
        %780 = vmatpush.bf16.msra.mxu0 %v695
        %781 = vmatmul.bf16.gmra.mxu0 %v740
        %v782 = vpop.f32.mrf.mxu0
        %v783 = vadd.f32 %v712, %v782
        %v784 = vpop.f32.mrf.mxu0
        %v785 = vadd.f32 %v717, %v784
        %786 = vmatmul.bf16.gmra.mxu0 %v743
        %v787 = vpop.f32.mrf.mxu0
        %v788 = vadd.f32 %v722, %v787
        %v789 = vpop.f32.mrf.mxu0
        %v790 = vadd.f32 %v727, %v789
        %791 = vdwg.mxu0
        %792 = vmatpush.bf16.msra.mxu0 0
        %793 = vmatpush.bf16.msra.mxu0 0
        %794 = vmatpush.bf16.msra.mxu0 0
        %795 = vmatpush.bf16.msra.mxu0 %v752
        %796 = vmatpush.bf16.msra.mxu0 %v705
        %797 = vmatpush.bf16.msra.mxu0 %v702
        %798 = vmatpush.bf16.msra.mxu0 %v699
        %799 = vmatpush.bf16.msra.mxu0 %v696
        %800 = vmatmul.bf16.gmra.mxu0 %v740
        %v801 = vpop.f32.mrf.mxu0
        %v802 = vadd.f32 %v712, %v801
        %v803 = vpop.f32.mrf.mxu0
        %v804 = vadd.f32 %v717, %v803
        %805 = vmatmul.bf16.gmra.mxu0 %v743
        %v806 = vpop.f32.mrf.mxu0
        %v807 = vadd.f32 %v722, %v806
        %v808 = vpop.f32.mrf.mxu0
        %v809 = vadd.f32 %v727, %v808
        %810 = vdwg.mxu0
        %811 = vrot.lane.b32.xlu0 %v573, 109
        %v812 = vpop.permute.xlu0 %811
        %813 = vrot.lane.b32.xlu0 %v574, 109
        %v814 = vpop.permute.xlu0 %813
        %815 = vrot.lane.b32.xlu0 %v575, 109
        %v816 = vpop.permute.xlu0 %815
        %v817 = vsel %vm394, %v812, %v814
        %v818 = vsel %vm394, %v814, %v816
        %v822 = vmul.f32 %v764, %v817
        %v823 = vmul.f32 %v783, %v818
        %v824 = vmul.f32 %v802, %v816
        %v825 = vmul.f32 %v766, %v817
        %v826 = vmul.f32 %v785, %v818
        %v827 = vmul.f32 %v804, %v816
        %v828 = vmul.f32 %v769, %v817
        %v829 = vmul.f32 %v788, %v818
        %v830 = vmul.f32 %v807, %v816
        %v831 = vmul.f32 %v771, %v817
        %v832 = vmul.f32 %v790, %v818
        %v833 = vmul.f32 %v809, %v816
        %v834 = vld [vmem:[%s6] sm:$0x3]
        %v835 = vld [vmem:[%s7] sm:$0x7]
        %848 = vrot.lane.b32.xlu0 %v822, 127
        %v849 = vpop.permute.xlu0 %848
        %850 = vrot.lane.b32.xlu0 %v823, 127
        %v851 = vpop.permute.xlu0 %850
        %852 = vrot.lane.b32.xlu0 %v824, 127
        %v853 = vpop.permute.xlu0 %852
        %854 = vrot.lane.b32.xlu0 %v825, 127
        %v855 = vpop.permute.xlu0 %854
        %856 = vrot.lane.b32.xlu0 %v826, 127
        %v857 = vpop.permute.xlu0 %856
        %858 = vrot.lane.b32.xlu0 %v827, 127
        %v859 = vpop.permute.xlu0 %858
        %860 = vrot.lane.b32.xlu0 %v828, 127
        %v861 = vpop.permute.xlu0 %860
        %862 = vrot.lane.b32.xlu0 %v829, 127
        %v863 = vpop.permute.xlu0 %862
        %864 = vrot.lane.b32.xlu0 %v830, 127
        %v865 = vpop.permute.xlu0 %864
        %866 = vrot.lane.b32.xlu0 %v831, 127
        %v867 = vpop.permute.xlu0 %866
        %868 = vrot.lane.b32.xlu0 %v832, 127
        %v869 = vpop.permute.xlu0 %868
        %870 = vrot.lane.b32.xlu0 %v833, 127
        %v871 = vpop.permute.xlu0 %870
        %v872 = vsel %vm346, %v849, %v851
        %v873 = vsel %vm346, %v851, %v853
        %v874 = vsel %vm346, %v855, %v857
        %v875 = vsel %vm346, %v857, %v859
        %v876 = vsel %vm346, %v861, %v863
        %v877 = vsel %vm346, %v863, %v865
        %v878 = vsel %vm346, %v867, %v869
        %v879 = vsel %vm346, %v869, %v871
        %892 = vrot.lane.b32.xlu0 %v822, 110
        %v893 = vpop.permute.xlu0 %892
        %894 = vrot.lane.b32.xlu0 %v823, 110
        %v895 = vpop.permute.xlu0 %894
        %896 = vrot.lane.b32.xlu0 %v824, 110
        %v897 = vpop.permute.xlu0 %896
        %898 = vrot.lane.b32.xlu0 %v825, 110
        %v899 = vpop.permute.xlu0 %898
        %900 = vrot.lane.b32.xlu0 %v826, 110
        %v901 = vpop.permute.xlu0 %900
        %902 = vrot.lane.b32.xlu0 %v827, 110
        %v903 = vpop.permute.xlu0 %902
        %904 = vrot.lane.b32.xlu0 %v828, 110
        %v905 = vpop.permute.xlu0 %904
        %906 = vrot.lane.b32.xlu0 %v829, 110
        %v907 = vpop.permute.xlu0 %906
        %908 = vrot.lane.b32.xlu0 %v830, 110
        %v909 = vpop.permute.xlu0 %908
        %910 = vrot.lane.b32.xlu0 %v831, 110
        %v911 = vpop.permute.xlu0 %910
        %912 = vrot.lane.b32.xlu0 %v832, 110
        %v913 = vpop.permute.xlu0 %912
        %914 = vrot.lane.b32.xlu0 %v833, 110
        %v915 = vpop.permute.xlu0 %914
        %v916 = vsel %vm378, %v893, %v895
        %v917 = vsel %vm378, %v895, %v897
        %v918 = vsel %vm378, %v899, %v901
        %v919 = vsel %vm378, %v901, %v903
        %v920 = vsel %vm378, %v905, %v907
        %v921 = vsel %vm378, %v907, %v909
        %v922 = vsel %vm378, %v911, %v913
        %v923 = vsel %vm378, %v913, %v915
        %936 = vrot.lane.b32.xlu0 %v822, 109
        %v937 = vpop.permute.xlu0 %936
        %938 = vrot.lane.b32.xlu0 %v823, 109
        %v939 = vpop.permute.xlu0 %938
        %940 = vrot.lane.b32.xlu0 %v824, 109
        %v941 = vpop.permute.xlu0 %940
        %942 = vrot.lane.b32.xlu0 %v825, 109
        %v943 = vpop.permute.xlu0 %942
        %944 = vrot.lane.b32.xlu0 %v826, 109
        %v945 = vpop.permute.xlu0 %944
        %946 = vrot.lane.b32.xlu0 %v827, 109
        %v947 = vpop.permute.xlu0 %946
        %948 = vrot.lane.b32.xlu0 %v828, 109
        %v949 = vpop.permute.xlu0 %948
        %950 = vrot.lane.b32.xlu0 %v829, 109
        %v951 = vpop.permute.xlu0 %950
        %952 = vrot.lane.b32.xlu0 %v830, 109
        %v953 = vpop.permute.xlu0 %952
        %954 = vrot.lane.b32.xlu0 %v831, 109
        %v955 = vpop.permute.xlu0 %954
        %956 = vrot.lane.b32.xlu0 %v832, 109
        %v957 = vpop.permute.xlu0 %956
        %958 = vrot.lane.b32.xlu0 %v833, 109
        %v959 = vpop.permute.xlu0 %958
        %v960 = vsel %vm394, %v937, %v939
        %v961 = vsel %vm394, %v939, %v941
        %v962 = vsel %vm394, %v943, %v945
        %v963 = vsel %vm394, %v945, %v947
        %v964 = vsel %vm394, %v949, %v951
        %v965 = vsel %vm394, %v951, %v953
        %v966 = vsel %vm394, %v955, %v957
        %v967 = vsel %vm394, %v957, %v959
        %v980 = vpack.c.bf16 %v825, %v822
        %v981 = vpack.c.bf16 %v826, %v823
        %v982 = vpack.c.bf16 %v827, %v824
        %v983 = vpack.c.bf16 %v831, %v828
        %v984 = vpack.c.bf16 %v832, %v829
        %v985 = vpack.c.bf16 %v833, %v830
        %v986 = vpack.c.bf16 %v874, %v872
        %v987 = vpack.c.bf16 %v875, %v873
        %v988 = vpack.c.bf16 %v859, %v853
        %v989 = vpack.c.bf16 %v878, %v876
        %v990 = vpack.c.bf16 %v879, %v877
        %v991 = vpack.c.bf16 %v871, %v865
        %v992 = vpack.c.bf16 %v918, %v916
        %v993 = vpack.c.bf16 %v919, %v917
        %v994 = vpack.c.bf16 %v903, %v897
        %v995 = vpack.c.bf16 %v922, %v920
        %v996 = vpack.c.bf16 %v923, %v921
        %v997 = vpack.c.bf16 %v915, %v909
        %v998 = vpack.c.bf16 %v962, %v960
        %v999 = vpack.c.bf16 %v963, %v961
        %v1000 = vpack.c.bf16 %v947, %v941
        %v1001 = vpack.c.bf16 %v966, %v964
        %v1002 = vpack.c.bf16 %v967, %v965
        %v1003 = vpack.c.bf16 %v959, %v953
        %1005 = vset.pattern.permute.xlu0 0
        %1006 = vperm.xlu0 %1005, %v835
        %v1007 = vpop.permute.xlu0 %1006
        %1009 = vmatpush.bf16.msra.mxu0 %v1001
        %1010 = vmatpush.bf16.msra.mxu0 %v998
        %1011 = vmatpush.bf16.msra.mxu0 %v995
        %1012 = vmatpush.bf16.msra.mxu0 %v992
        %1013 = vmatpush.bf16.msra.mxu0 %v989
        %1014 = vmatpush.bf16.msra.mxu0 %v986
        %1015 = vmatpush.bf16.msra.mxu0 %v983
        %1016 = vmatpush.bf16.msra.mxu0 %v980
        %1017 = vmatmul.bf16.gmra.mxu0 %v834
        %v1018 = vpop.f32.mrf.mxu0
        %v1019 = vadd.f32 %v1007, %v1018
        %v1020 = vpop.f32.mrf.mxu0
        %1021 = vdwg.mxu0
        %1022 = vmatpush.bf16.msra.mxu0 %v1002
        %1023 = vmatpush.bf16.msra.mxu0 %v999
        %1024 = vmatpush.bf16.msra.mxu0 %v996
        %1025 = vmatpush.bf16.msra.mxu0 %v993
        %1026 = vmatpush.bf16.msra.mxu0 %v990
        %1027 = vmatpush.bf16.msra.mxu0 %v987
        %1028 = vmatpush.bf16.msra.mxu0 %v984
        %1029 = vmatpush.bf16.msra.mxu0 %v981
        %1030 = vmatmul.bf16.gmra.mxu0 %v834
        %v1031 = vpop.f32.mrf.mxu0
        %v1032 = vadd.f32 %v1007, %v1031
        %v1033 = vpop.f32.mrf.mxu0
        %1034 = vdwg.mxu0
        %1035 = vmatpush.bf16.msra.mxu0 %v1003
        %1036 = vmatpush.bf16.msra.mxu0 %v1000
        %1037 = vmatpush.bf16.msra.mxu0 %v997
        %1038 = vmatpush.bf16.msra.mxu0 %v994
        %1039 = vmatpush.bf16.msra.mxu0 %v991
        %1040 = vmatpush.bf16.msra.mxu0 %v988
        %1041 = vmatpush.bf16.msra.mxu0 %v985
        %1042 = vmatpush.bf16.msra.mxu0 %v982
        %1043 = vmatmul.bf16.gmra.mxu0 %v834
        %v1044 = vpop.f32.mrf.mxu0
        %v1045 = vadd.f32 %v1007, %v1044
        %v1046 = vpop.f32.mrf.mxu0
        %1047 = vdwg.mxu0
        %v1050 = vrot.slane %v1032, 4
        %v1051 = vsel %vm495, %v1019, %v1050
        %1053 = vst [vmem:[%s325] sm:$0x77] %v1051
        %vm1054 = vcmask 550912
        %1055 = vst.msk [vmem:[%s325 + $0x8] sm:$0x7] %vm1054, %v1045
        %s1056 = scalar_lea.vmem %s6, 2
        %v1057 = vld [vmem:[%s1056] sm:$0x3]
        %v1058 = vld [vmem:[%s7] sm:$0x7]
        %1060 = vset.pattern.permute.xlu0 0
        %1061 = vperm.xlu0 %1060, %v1058
        %v1062 = vpop.permute.xlu0 %1061
        %1088 = vrot.lane.b32.xlu0 %v980, 127
        %v1089 = vpop.permute.xlu0 %1088
        %1090 = vrot.lane.b32.xlu0 %v981, 127
        %v1091 = vpop.permute.xlu0 %1090
        %1092 = vrot.lane.b32.xlu0 %v982, 127
        %v1093 = vpop.permute.xlu0 %1092
        %1094 = vrot.lane.b32.xlu0 %v983, 127
        %v1095 = vpop.permute.xlu0 %1094
        %1096 = vrot.lane.b32.xlu0 %v984, 127
        %v1097 = vpop.permute.xlu0 %1096
        %1098 = vrot.lane.b32.xlu0 %v985, 127
        %v1099 = vpop.permute.xlu0 %1098
        %1100 = vrot.lane.b32.xlu0 %v986, 127
        %v1101 = vpop.permute.xlu0 %1100
        %1102 = vrot.lane.b32.xlu0 %v987, 127
        %v1103 = vpop.permute.xlu0 %1102
        %1104 = vrot.lane.b32.xlu0 %v988, 127
        %v1105 = vpop.permute.xlu0 %1104
        %1106 = vrot.lane.b32.xlu0 %v989, 127
        %v1107 = vpop.permute.xlu0 %1106
        %1108 = vrot.lane.b32.xlu0 %v990, 127
        %v1109 = vpop.permute.xlu0 %1108
        %1110 = vrot.lane.b32.xlu0 %v991, 127
        %v1111 = vpop.permute.xlu0 %1110
        %1112 = vrot.lane.b32.xlu0 %v992, 127
        %v1113 = vpop.permute.xlu0 %1112
        %1114 = vrot.lane.b32.xlu0 %v993, 127
        %v1115 = vpop.permute.xlu0 %1114
        %1116 = vrot.lane.b32.xlu0 %v994, 127
        %v1117 = vpop.permute.xlu0 %1116
        %1118 = vrot.lane.b32.xlu0 %v995, 127
        %v1119 = vpop.permute.xlu0 %1118
        %1120 = vrot.lane.b32.xlu0 %v996, 127
        %v1121 = vpop.permute.xlu0 %1120
        %1122 = vrot.lane.b32.xlu0 %v997, 127
        %v1123 = vpop.permute.xlu0 %1122
        %1124 = vrot.lane.b32.xlu0 %v998, 127
        %v1125 = vpop.permute.xlu0 %1124
        %1126 = vrot.lane.b32.xlu0 %v999, 127
        %v1127 = vpop.permute.xlu0 %1126
        %1128 = vrot.lane.b32.xlu0 %v1000, 127
        %v1129 = vpop.permute.xlu0 %1128
        %1130 = vrot.lane.b32.xlu0 %v1001, 127
        %v1131 = vpop.permute.xlu0 %1130
        %1132 = vrot.lane.b32.xlu0 %v1002, 127
        %v1133 = vpop.permute.xlu0 %1132
        %1134 = vrot.lane.b32.xlu0 %v1003, 127
        %v1135 = vpop.permute.xlu0 %1134
        %vm1136 = vcmask 1039360
        %v1137 = vsel %vm1136, %v1089, %v1091
        %v1138 = vsel %vm1136, %v1091, %v1093
        %v1139 = vsel %vm1136, %v1095, %v1097
        %v1140 = vsel %vm1136, %v1097, %v1099
        %v1141 = vsel %vm1136, %v1101, %v1103
        %v1142 = vsel %vm1136, %v1103, %v1105
        %v1143 = vsel %vm1136, %v1107, %v1109
        %v1144 = vsel %vm1136, %v1109, %v1111
        %v1145 = vsel %vm1136, %v1113, %v1115
        %v1146 = vsel %vm1136, %v1115, %v1117
        %v1147 = vsel %vm1136, %v1119, %v1121
        %v1148 = vsel %vm1136, %v1121, %v1123
        %v1149 = vsel %vm1136, %v1125, %v1127
        %v1150 = vsel %vm1136, %v1127, %v1129
        %v1151 = vsel %vm1136, %v1131, %v1133
        %v1152 = vsel %vm1136, %v1133, %v1135
        %1177 = vmatpush.bf16.msra.mxu0 %v1151
        %1178 = vmatpush.bf16.msra.mxu0 %v1149
        %1179 = vmatpush.bf16.msra.mxu0 %v1147
        %1180 = vmatpush.bf16.msra.mxu0 %v1145
        %1181 = vmatpush.bf16.msra.mxu0 %v1143
        %1182 = vmatpush.bf16.msra.mxu0 %v1141
        %1183 = vmatpush.bf16.msra.mxu0 %v1139
        %1184 = vmatpush.bf16.msra.mxu0 %v1137
        %1185 = vmatmul.bf16.gmra.mxu0 %v1057
        %v1186 = vpop.f32.mrf.mxu0
        %v1187 = vadd.f32 %v1062, %v1186
        %v1188 = vpop.f32.mrf.mxu0
        %1189 = vdwg.mxu0
        %1190 = vmatpush.bf16.msra.mxu0 %v1152
        %1191 = vmatpush.bf16.msra.mxu0 %v1150
        %1192 = vmatpush.bf16.msra.mxu0 %v1148
        %1193 = vmatpush.bf16.msra.mxu0 %v1146
        %1194 = vmatpush.bf16.msra.mxu0 %v1144
        %1195 = vmatpush.bf16.msra.mxu0 %v1142
        %1196 = vmatpush.bf16.msra.mxu0 %v1140
        %1197 = vmatpush.bf16.msra.mxu0 %v1138
        %1198 = vmatmul.bf16.gmra.mxu0 %v1057
        %v1199 = vpop.f32.mrf.mxu0
        %v1200 = vadd.f32 %v1062, %v1199
        %v1201 = vpop.f32.mrf.mxu0
        %1202 = vdwg.mxu0
        %1203 = vmatpush.bf16.msra.mxu0 %v1135
        %1204 = vmatpush.bf16.msra.mxu0 %v1129
        %1205 = vmatpush.bf16.msra.mxu0 %v1123
        %1206 = vmatpush.bf16.msra.mxu0 %v1117
        %1207 = vmatpush.bf16.msra.mxu0 %v1111
        %1208 = vmatpush.bf16.msra.mxu0 %v1105
        %1209 = vmatpush.bf16.msra.mxu0 %v1099
        %1210 = vmatpush.bf16.msra.mxu0 %v1093
        %1211 = vmatmul.bf16.gmra.mxu0 %v1057
        %v1212 = vpop.f32.mrf.mxu0
        %v1213 = vadd.f32 %v1062, %v1212
        %v1214 = vpop.f32.mrf.mxu0
        %1215 = vdwg.mxu0
        %v1218 = vrot.slane %v1200, 4
        %v1219 = vsel %vm495, %v1187, %v1218
        %s1221 = scalar_lea.vmem %s325, 12
        %1222 = vst [vmem:[%s1221] sm:$0x77] %v1219
        %1223 = vst.msk [vmem:[%s1221 + $0x8] sm:$0x7] %vm1054, %v1213
        %s1224 = scalar_lea.vmem %s6, 4
        %v1225 = vld [vmem:[%s1224] sm:$0x3]
        %v1226 = vld [vmem:[%s7] sm:$0x7]
        %1228 = vset.pattern.permute.xlu0 0
        %1229 = vperm.xlu0 %1228, %v1226
        %v1230 = vpop.permute.xlu0 %1229
        %1232 = vrot.lane.b32.xlu0 %v980, 110
        %v1233 = vpop.permute.xlu0 %1232
        %1234 = vrot.lane.b32.xlu0 %v981, 110
        %v1235 = vpop.permute.xlu0 %1234
        %1236 = vrot.lane.b32.xlu0 %v982, 110
        %v1237 = vpop.permute.xlu0 %1236
        %1238 = vrot.lane.b32.xlu0 %v983, 110
        %v1239 = vpop.permute.xlu0 %1238
        %1240 = vrot.lane.b32.xlu0 %v984, 110
        %v1241 = vpop.permute.xlu0 %1240
        %1242 = vrot.lane.b32.xlu0 %v985, 110
        %v1243 = vpop.permute.xlu0 %1242
        %1244 = vrot.lane.b32.xlu0 %v986, 110
        %v1245 = vpop.permute.xlu0 %1244
        %1246 = vrot.lane.b32.xlu0 %v987, 110
        %v1247 = vpop.permute.xlu0 %1246
        %1248 = vrot.lane.b32.xlu0 %v988, 110
        %v1249 = vpop.permute.xlu0 %1248
        %1250 = vrot.lane.b32.xlu0 %v989, 110
        %v1251 = vpop.permute.xlu0 %1250
        %1252 = vrot.lane.b32.xlu0 %v990, 110
        %v1253 = vpop.permute.xlu0 %1252
        %1254 = vrot.lane.b32.xlu0 %v991, 110
        %v1255 = vpop.permute.xlu0 %1254
        %1256 = vrot.lane.b32.xlu0 %v992, 110
        %v1257 = vpop.permute.xlu0 %1256
        %1258 = vrot.lane.b32.xlu0 %v993, 110
        %v1259 = vpop.permute.xlu0 %1258
        %1260 = vrot.lane.b32.xlu0 %v994, 110
        %v1261 = vpop.permute.xlu0 %1260
        %1262 = vrot.lane.b32.xlu0 %v995, 110
        %v1263 = vpop.permute.xlu0 %1262
        %1264 = vrot.lane.b32.xlu0 %v996, 110
        %v1265 = vpop.permute.xlu0 %1264
        %1266 = vrot.lane.b32.xlu0 %v997, 110
        %v1267 = vpop.permute.xlu0 %1266
        %1268 = vrot.lane.b32.xlu0 %v998, 110
        %v1269 = vpop.permute.xlu0 %1268
        %1270 = vrot.lane.b32.xlu0 %v999, 110
        %v1271 = vpop.permute.xlu0 %1270
        %1272 = vrot.lane.b32.xlu0 %v1000, 110
        %v1273 = vpop.permute.xlu0 %1272
        %1274 = vrot.lane.b32.xlu0 %v1001, 110
        %v1275 = vpop.permute.xlu0 %1274
        %1276 = vrot.lane.b32.xlu0 %v1002, 110
        %v1277 = vpop.permute.xlu0 %1276
        %1278 = vrot.lane.b32.xlu0 %v1003, 110
        %v1279 = vpop.permute.xlu0 %1278
        %vm1280 = vcmask 900096
        %v1281 = vsel %vm1280, %v1233, %v1235
        %v1282 = vsel %vm1280, %v1235, %v1237
        %v1283 = vsel %vm1280, %v1239, %v1241
        %v1284 = vsel %vm1280, %v1241, %v1243
        %v1285 = vsel %vm1280, %v1245, %v1247
        %v1286 = vsel %vm1280, %v1247, %v1249
        %v1287 = vsel %vm1280, %v1251, %v1253
        %v1288 = vsel %vm1280, %v1253, %v1255
        %v1289 = vsel %vm1280, %v1257, %v1259
        %v1290 = vsel %vm1280, %v1259, %v1261
        %v1291 = vsel %vm1280, %v1263, %v1265
        %v1292 = vsel %vm1280, %v1265, %v1267
        %v1293 = vsel %vm1280, %v1269, %v1271
        %v1294 = vsel %vm1280, %v1271, %v1273
        %v1295 = vsel %vm1280, %v1275, %v1277
        %v1296 = vsel %vm1280, %v1277, %v1279
        %1321 = vmatpush.bf16.msra.mxu0 %v1295
        %1322 = vmatpush.bf16.msra.mxu0 %v1293
        %1323 = vmatpush.bf16.msra.mxu0 %v1291
        %1324 = vmatpush.bf16.msra.mxu0 %v1289
        %1325 = vmatpush.bf16.msra.mxu0 %v1287
        %1326 = vmatpush.bf16.msra.mxu0 %v1285
        %1327 = vmatpush.bf16.msra.mxu0 %v1283
        %1328 = vmatpush.bf16.msra.mxu0 %v1281
        %1329 = vmatmul.bf16.gmra.mxu0 %v1225
        %v1330 = vpop.f32.mrf.mxu0
        %v1331 = vadd.f32 %v1230, %v1330
        %v1332 = vpop.f32.mrf.mxu0
        %1333 = vdwg.mxu0
        %1334 = vmatpush.bf16.msra.mxu0 %v1296
        %1335 = vmatpush.bf16.msra.mxu0 %v1294
        %1336 = vmatpush.bf16.msra.mxu0 %v1292
        %1337 = vmatpush.bf16.msra.mxu0 %v1290
        %1338 = vmatpush.bf16.msra.mxu0 %v1288
        %1339 = vmatpush.bf16.msra.mxu0 %v1286
        %1340 = vmatpush.bf16.msra.mxu0 %v1284
        %1341 = vmatpush.bf16.msra.mxu0 %v1282
        %1342 = vmatmul.bf16.gmra.mxu0 %v1225
        %v1343 = vpop.f32.mrf.mxu0
        %v1344 = vadd.f32 %v1230, %v1343
        %v1345 = vpop.f32.mrf.mxu0
        %1346 = vdwg.mxu0
        %1347 = vmatpush.bf16.msra.mxu0 %v1279
        %1348 = vmatpush.bf16.msra.mxu0 %v1273
        %1349 = vmatpush.bf16.msra.mxu0 %v1267
        %1350 = vmatpush.bf16.msra.mxu0 %v1261
        %1351 = vmatpush.bf16.msra.mxu0 %v1255
        %1352 = vmatpush.bf16.msra.mxu0 %v1249
        %1353 = vmatpush.bf16.msra.mxu0 %v1243
        %1354 = vmatpush.bf16.msra.mxu0 %v1237
        %1355 = vmatmul.bf16.gmra.mxu0 %v1225
        %v1356 = vpop.f32.mrf.mxu0
        %v1357 = vadd.f32 %v1230, %v1356
        %v1358 = vpop.f32.mrf.mxu0
        %1359 = vdwg.mxu0
        %v1362 = vrot.slane %v1344, 4
        %v1363 = vsel %vm495, %v1331, %v1362
        %s1365 = scalar_lea.vmem %s325, 24
        %1366 = vst [vmem:[%s1365] sm:$0x77] %v1363
        %1367 = vst.msk [vmem:[%s1365 + $0x8] sm:$0x7] %vm1054, %v1357
        %s1368 = scalar_lea.vmem %s6, 6
        %v1369 = vld [vmem:[%s1368] sm:$0x3]
        %v1370 = vld [vmem:[%s7] sm:$0x7]
        %1372 = vset.pattern.permute.xlu0 0
        %1373 = vperm.xlu0 %1372, %v1370
        %v1374 = vpop.permute.xlu0 %1373
        %1376 = vrot.lane.b32.xlu0 %v980, 109
        %v1377 = vpop.permute.xlu0 %1376
        %1378 = vrot.lane.b32.xlu0 %v981, 109
        %v1379 = vpop.permute.xlu0 %1378
        %1380 = vrot.lane.b32.xlu0 %v982, 109
        %v1381 = vpop.permute.xlu0 %1380
        %1382 = vrot.lane.b32.xlu0 %v983, 109
        %v1383 = vpop.permute.xlu0 %1382
        %1384 = vrot.lane.b32.xlu0 %v984, 109
        %v1385 = vpop.permute.xlu0 %1384
        %1386 = vrot.lane.b32.xlu0 %v985, 109
        %v1387 = vpop.permute.xlu0 %1386
        %1388 = vrot.lane.b32.xlu0 %v986, 109
        %v1389 = vpop.permute.xlu0 %1388
        %1390 = vrot.lane.b32.xlu0 %v987, 109
        %v1391 = vpop.permute.xlu0 %1390
        %1392 = vrot.lane.b32.xlu0 %v988, 109
        %v1393 = vpop.permute.xlu0 %1392
        %1394 = vrot.lane.b32.xlu0 %v989, 109
        %v1395 = vpop.permute.xlu0 %1394
        %1396 = vrot.lane.b32.xlu0 %v990, 109
        %v1397 = vpop.permute.xlu0 %1396
        %1398 = vrot.lane.b32.xlu0 %v991, 109
        %v1399 = vpop.permute.xlu0 %1398
        %1400 = vrot.lane.b32.xlu0 %v992, 109
        %v1401 = vpop.permute.xlu0 %1400
        %1402 = vrot.lane.b32.xlu0 %v993, 109
        %v1403 = vpop.permute.xlu0 %1402
        %1404 = vrot.lane.b32.xlu0 %v994, 109
        %v1405 = vpop.permute.xlu0 %1404
        %1406 = vrot.lane.b32.xlu0 %v995, 109
        %v1407 = vpop.permute.xlu0 %1406
        %1408 = vrot.lane.b32.xlu0 %v996, 109
        %v1409 = vpop.permute.xlu0 %1408
        %1410 = vrot.lane.b32.xlu0 %v997, 109
        %v1411 = vpop.permute.xlu0 %1410
        %1412 = vrot.lane.b32.xlu0 %v998, 109
        %v1413 = vpop.permute.xlu0 %1412
        %1414 = vrot.lane.b32.xlu0 %v999, 109
        %v1415 = vpop.permute.xlu0 %1414
        %1416 = vrot.lane.b32.xlu0 %v1000, 109
        %v1417 = vpop.permute.xlu0 %1416
        %1418 = vrot.lane.b32.xlu0 %v1001, 109
        %v1419 = vpop.permute.xlu0 %1418
        %1420 = vrot.lane.b32.xlu0 %v1002, 109
        %v1421 = vpop.permute.xlu0 %1420
        %1422 = vrot.lane.b32.xlu0 %v1003, 109
        %v1423 = vpop.permute.xlu0 %1422
        %vm1424 = vcmask 891904
        %v1425 = vsel %vm1424, %v1377, %v1379
        %v1426 = vsel %vm1424, %v1379, %v1381
        %v1427 = vsel %vm1424, %v1383, %v1385
        %v1428 = vsel %vm1424, %v1385, %v1387
        %v1429 = vsel %vm1424, %v1389, %v1391
        %v1430 = vsel %vm1424, %v1391, %v1393
        %v1431 = vsel %vm1424, %v1395, %v1397
        %v1432 = vsel %vm1424, %v1397, %v1399
        %v1433 = vsel %vm1424, %v1401, %v1403
        %v1434 = vsel %vm1424, %v1403, %v1405
        %v1435 = vsel %vm1424, %v1407, %v1409
        %v1436 = vsel %vm1424, %v1409, %v1411
        %v1437 = vsel %vm1424, %v1413, %v1415
        %v1438 = vsel %vm1424, %v1415, %v1417
        %v1439 = vsel %vm1424, %v1419, %v1421
        %v1440 = vsel %vm1424, %v1421, %v1423
        %1465 = vmatpush.bf16.msra.mxu0 %v1439
        %1466 = vmatpush.bf16.msra.mxu0 %v1437
        %1467 = vmatpush.bf16.msra.mxu0 %v1435
        %1468 = vmatpush.bf16.msra.mxu0 %v1433
        %1469 = vmatpush.bf16.msra.mxu0 %v1431
        %1470 = vmatpush.bf16.msra.mxu0 %v1429
        %1471 = vmatpush.bf16.msra.mxu0 %v1427
        %1472 = vmatpush.bf16.msra.mxu0 %v1425
        %1473 = vmatmul.bf16.gmra.mxu0 %v1369
        %v1474 = vpop.f32.mrf.mxu0
        %v1475 = vadd.f32 %v1374, %v1474
        %v1476 = vpop.f32.mrf.mxu0
        %1477 = vdwg.mxu0
        %1478 = vmatpush.bf16.msra.mxu0 %v1440
        %1479 = vmatpush.bf16.msra.mxu0 %v1438
        %1480 = vmatpush.bf16.msra.mxu0 %v1436
        %1481 = vmatpush.bf16.msra.mxu0 %v1434
        %1482 = vmatpush.bf16.msra.mxu0 %v1432
        %1483 = vmatpush.bf16.msra.mxu0 %v1430
        %1484 = vmatpush.bf16.msra.mxu0 %v1428
        %1485 = vmatpush.bf16.msra.mxu0 %v1426
        %1486 = vmatmul.bf16.gmra.mxu0 %v1369
        %v1487 = vpop.f32.mrf.mxu0
        %v1488 = vadd.f32 %v1374, %v1487
        %v1489 = vpop.f32.mrf.mxu0
        %1490 = vdwg.mxu0
        %1491 = vmatpush.bf16.msra.mxu0 %v1423
        %1492 = vmatpush.bf16.msra.mxu0 %v1417
        %1493 = vmatpush.bf16.msra.mxu0 %v1411
        %1494 = vmatpush.bf16.msra.mxu0 %v1405
        %1495 = vmatpush.bf16.msra.mxu0 %v1399
        %1496 = vmatpush.bf16.msra.mxu0 %v1393
        %1497 = vmatpush.bf16.msra.mxu0 %v1387
        %1498 = vmatpush.bf16.msra.mxu0 %v1381
        %1499 = vmatmul.bf16.gmra.mxu0 %v1369
        %v1500 = vpop.f32.mrf.mxu0
        %v1501 = vadd.f32 %v1374, %v1500
        %v1502 = vpop.f32.mrf.mxu0
        %1503 = vdwg.mxu0
        %v1506 = vrot.slane %v1488, 4
        %v1507 = vsel %vm495, %v1475, %v1506
        %s1509 = scalar_lea.vmem %s325, 36
        %1510 = vst [vmem:[%s1509] sm:$0x77] %v1507
        %1511 = vst.msk [vmem:[%s1509 + $0x8] sm:$0x7] %vm1054, %v1501
        %p1512 = scmp.lt.s32.totalorder %s22, 1
        %s1513 = scalar_select %p1512, %s22, 1
        %s1514 = smul.addr %s1513, 12
        %s1515 = smul.addr %s1514, 4
        %s1516 = scalar_lea.vmem %s8, %s1515
        // Predicated region
        $region57: #{tpu_custom_call.1} parent=51 // pred_check
          %p1517 = pneg %p213
        $region58: #{tpu_custom_call.1} parent=51 // pred_check_branch
          %1519 = sbr.rel (%p1517) target = $region60
        $region59: #{tpu_custom_call.1} parent=51 // pred_region
          _
        $region60: #{tpu_custom_call.1} parent=51 // pred_fallthru
          _
      $region52: #{tpu_custom_call.1} parent=5 // pred_fallthru
        _
      %p1520 = scmp.le.s32.totalorder 2, %s17
      // Predicated region
      $region61: #{tpu_custom_call.1} parent=5 // pred_check
        %p1521 = pneg %p1520
      $region62: #{tpu_custom_call.1} parent=5 // pred_check_branch
        %1523 = sbr.rel (%p1521) target = $region64
      $region63: #{tpu_custom_call.1} parent=5 // pred_region
        %s1524 = ssub.s32 %s17, 2
        // Predicated region
        $region65: #{tpu_custom_call.1} parent=63 // pred_check
          %p1525 = pneg %p219
        $region66: #{tpu_custom_call.1} parent=63 // pred_check_branch
          %1527 = sbr.rel (%p1525) target = $region68
        $region67: #{tpu_custom_call.1} parent=63 // pred_region
          %p1528 = scmp.lt.s32.totalorder %s23, 1
          %s1529 = scalar_select %p1528, %s23, 1
          %s1530 = smul.addr %s1529, 12
          %s1531 = smul.addr %s1530, 4
          %s1532 = scalar_lea.vmem %s8, %s1531
        $region68: #{tpu_custom_call.1} parent=63 // pred_fallthru
          _
      $region64: #{tpu_custom_call.1} parent=5 // pred_fallthru
        _
    $region6: #{tpu_custom_call.1} parent=1 // loop_footer
      %s21 = sadd.s32 1, %s17
    $region7: #{tpu_custom_call.1} parent=1 // loop_footer_branch
      %16 = sbr.rel target = $region3
    $region8: #{tpu_custom_call.1} parent=1 // loop_exit
      _
    %1533 = vsyncpa [#allocation3], 1
    %s1534 = scalar_lea.sflag [#allocation3], 1
    %1535 = vsyncpa %s1534, 1

</llo_original>
